<compile_context>
chip_gen: v6e
topology: v6e:2x2x1
jax: 0.10.0
libtpu: 0.0.40
codegen_flags: <defaults>
</compile_context>

<pallas_src>
import functools

import jax
import jax.numpy as jnp
from jax.experimental import pallas as pl
from jax.experimental.pallas import tpu as pltpu


# ---------------------------------------------------------------------------
# Fused C3 kernel (one grid step per batch element)
# ---------------------------------------------------------------------------
def _c3_kernel(x_ref, w1_ref, b1_ref, w2_ref, b2_ref, wm1_ref, bm1_ref,
               wm2_ref, bm2_ref, w3a_ref, w3b_ref, b3_ref, mask_ref, o_ref,
               *, W, pad, shortcut):
    HW = x_ref.shape[2]
    c_ = wm1_ref.shape[0]

    def relu(v):
        return jnp.maximum(v, 0.0)

    x = x_ref[0].astype(jnp.float32)                           # [c1, HW]

    # cv1 / cv2: 1x1 conv (+ folded BN) + ReLU  -> [c_, HW]
    y1 = relu(jnp.dot(w1_ref[...], x, preferred_element_type=jnp.float32)
              + b1_ref[...])
    y2 = relu(jnp.dot(w2_ref[...], x, preferred_element_type=jnp.float32)
              + b2_ref[...])

    # Bottleneck.cv1: 1x1 conv + BN + ReLU
    h1 = relu(jnp.dot(wm1_ref[...], y1, preferred_element_type=jnp.float32)
              + bm1_ref[...])

    # Bottleneck.cv2: 3x3 conv, padding=1, via 9 masked lane-shifted matmuls.
    # token t = h*W + w ; neighbor (h+dh, w+dw) lives at t + dh*W + dw.
    zeros = jnp.zeros((c_, pad), jnp.float32)
    padded = jnp.concatenate([zeros, h1, zeros], axis=1)       # [c_, HW+2*pad]
    acc = jnp.zeros((c_, HW), jnp.float32)
    for k in range(9):
        kh, kw = k // 3, k % 3
        s = (kh - 1) * W + (kw - 1)
        slab = padded[:, pad + s: pad + s + HW]                # [c_, HW]
        m = mask_ref[k:k + 1, :]                               # [1, HW]
        acc = acc + jnp.dot(wm2_ref[k], slab * m,
                            preferred_element_type=jnp.float32)
    z = relu(acc + bm2_ref[...])

    # Bottleneck residual (shortcut and c1 == c2 inside the bottleneck)
    mb = y1 + z if shortcut else z

    # cv3 on concat([m(cv1(x)), cv2(x)]) with pre-split weight (no concat)
    out = relu(jnp.dot(w3a_ref[...], mb, preferred_element_type=jnp.float32)
               + jnp.dot(w3b_ref[...], y2, preferred_element_type=jnp.float32)
               + b3_ref[...])
    o_ref[0] = out.astype(o_ref.dtype)


# ---------------------------------------------------------------------------
# Parameter construction & BN folding (inference-mode BatchNorm)
# ---------------------------------------------------------------------------
def init_params(key, c1, c2, e=0.5):
    c_ = int(c2 * e)
    keys = iter(jax.random.split(key, 32))

    def conv_w(cout, cin, k):
        fan = cin * k * k
        return (fan ** -0.5) * jax.random.normal(next(keys), (cout, cin, k, k),
                                                 jnp.float32)

    def bn(c):
        return {
            "gamma": 1.0 + 0.1 * jax.random.normal(next(keys), (c,), jnp.float32),
            "beta": 0.1 * jax.random.normal(next(keys), (c,), jnp.float32),
            "mean": 0.1 * jax.random.normal(next(keys), (c,), jnp.float32),
            "var": jnp.abs(jax.random.normal(next(keys), (c,), jnp.float32)) + 0.5,
        }

    return {
        "cv1": {"w": conv_w(c_, c1, 1), "bn": bn(c_)},
        "cv2": {"w": conv_w(c_, c1, 1), "bn": bn(c_)},
        "m_cv1": {"w": conv_w(c_, c_, 1), "bn": bn(c_)},
        "m_cv2": {"w": conv_w(c_, c_, 3), "bn": bn(c_)},
        "cv3": {"w": conv_w(c2, 2 * c_, 1), "bn": bn(c2)},
    }


def _fold_bn(p, eps=1e-5):
    # Inference-mode BN folded into the (bias-free) conv: y = conv(x)*s + b
    w, b = p["w"], p["bn"]
    scale = b["gamma"] / jnp.sqrt(b["var"] + eps)
    return w * scale[:, None, None, None], b["beta"] - b["mean"] * scale


# ---------------------------------------------------------------------------
# C3 forward (single fused pallas_call, gridded over batch)
# ---------------------------------------------------------------------------
def c3_forward(x, params, *, c2, e=0.5, shortcut=True):
    B, c1, H, W = x.shape
    c_ = int(c2 * e)
    HW = H * W
    pad = max(128, pl.cdiv(W + 1, 128) * 128)   # lane-aligned shift headroom

    # Fold BN and reshape weights for the channels-first kernel layout.
    w1, b1 = _fold_bn(params["cv1"])
    w2, b2 = _fold_bn(params["cv2"])
    wm1, bm1 = _fold_bn(params["m_cv1"])
    wm2, bm2 = _fold_bn(params["m_cv2"])
    w3, b3 = _fold_bn(params["cv3"])
    w1 = w1.reshape(c_, c1); b1 = b1.reshape(c_, 1)
    w2 = w2.reshape(c_, c1); b2 = b2.reshape(c_, 1)
    wm1 = wm1.reshape(c_, c_); bm1 = bm1.reshape(c_, 1)
    wm2 = wm2.transpose(2, 3, 0, 1).reshape(9, c_, c_)   # [kh*3+kw, co, ci]
    bm2 = bm2.reshape(c_, 1)
    w3 = w3.reshape(c2, 2 * c_)
    w3a, w3b = w3[:, :c_], w3[:, c_:]
    b3 = b3.reshape(c2, 1)

    # Per-token validity masks for the 9 taps of the padded 3x3 conv.
    t = jnp.arange(HW)
    hh, ww = t // W, t % W
    masks = []
    for kh in range(3):
        for kw in range(3):
            dh, dw = kh - 1, kw - 1
            masks.append((hh + dh >= 0) & (hh + dh < H) &
                         (ww + dw >= 0) & (ww + dw < W))
    masks = jnp.stack(masks, axis=0).astype(jnp.float32)       # [9, HW]

    x_cf = x.reshape(B, c1, HW).astype(jnp.float32)            # channels-first

    def full(shape):
        return pl.BlockSpec(shape, lambda b, _s=shape: (0,) * len(_s))

    kernel = functools.partial(_c3_kernel, W=W, pad=pad, shortcut=shortcut)
    out = pl.pallas_call(
        kernel,
        out_shape=jax.ShapeDtypeStruct((B, c2, HW), x.dtype),
        grid=(B,),
        in_specs=[
            pl.BlockSpec((1, c1, HW), lambda b: (b, 0, 0)),
            full((c_, c1)), full((c_, 1)),
            full((c_, c1)), full((c_, 1)),
            full((c_, c_)), full((c_, 1)),
            full((9, c_, c_)), full((c_, 1)),
            full((c2, c_)), full((c2, c_)), full((c2, 1)),
            full((9, HW)),
        ],
        out_specs=pl.BlockSpec((1, c2, HW), lambda b: (b, 0, 0)),
        compiler_params=pltpu.CompilerParams(dimension_semantics=("parallel",)),
    )(x_cf, w1, b1, w2, b2, wm1, bm1, wm2, bm2, w3a, w3b, b3, masks)
    return out.reshape(B, c2, H, W)


# ---------------------------------------------------------------------------
# Pure-JAX reference (for correctness validation)
# ---------------------------------------------------------------------------
def _conv_bn_relu_ref(x, p, k, eps=1e-5):
    pd = k // 2
    y = jax.lax.conv_general_dilated(
        x, p["w"], window_strides=(1, 1), padding=((pd, pd), (pd, pd)),
        dimension_numbers=("NCHW", "OIHW", "NCHW"))
    bn = p["bn"]
    scale = bn["gamma"] / jnp.sqrt(bn["var"] + eps)
    shift = bn["beta"] - bn["mean"] * scale
    return jnp.maximum(y * scale[None, :, None, None]
                       + shift[None, :, None, None], 0.0)


def c3_reference(x, params, *, c2, e=0.5, shortcut=True):
    y1 = _conv_bn_relu_ref(x, params["cv1"], 1)
    y2 = _conv_bn_relu_ref(x, params["cv2"], 1)
    h = _conv_bn_relu_ref(y1, params["m_cv1"], 1)
    h = _conv_bn_relu_ref(h, params["m_cv2"], 3)
    mb = y1 + h if shortcut else h
    return _conv_bn_relu_ref(jnp.concatenate([mb, y2], axis=1),
                             params["cv3"], 1)


if __name__ == "__main__":
    B, c1, c2 = 2, 4, 8
    H = W = 16

    key = jax.random.PRNGKey(0)
    kx, kp = jax.random.split(key)
    x = jax.random.normal(kx, (B, c1, H, W), jnp.float32)
    params = init_params(kp, c1, c2)

    fwd = jax.jit(functools.partial(c3_forward, c2=c2))
    y = fwd(x, params)
    jax.block_until_ready(y)

    y_ref = jax.jit(functools.partial(c3_reference, c2=c2))(x, params)
    err = float(jnp.max(jnp.abs(y - y_ref)))
    assert y.shape == (B, c2, H, W) and y.dtype == x.dtype
    assert err < 1e-3, f"max abs error vs reference: {err}"
    print("KERNEL_OK")
</pallas_src>

<mosaic_0001>
module attributes {stable_mosaic.version = 11 : i64} {
  func.func @_c3_kernel(%arg0: i32, %arg1: memref<1x4x256xf32, #tpu.memory_space<vmem>>, %arg2: memref<4x4xf32, #tpu.memory_space<vmem>>, %arg3: memref<4x1xf32, #tpu.memory_space<vmem>>, %arg4: memref<4x4xf32, #tpu.memory_space<vmem>>, %arg5: memref<4x1xf32, #tpu.memory_space<vmem>>, %arg6: memref<4x4xf32, #tpu.memory_space<vmem>>, %arg7: memref<4x1xf32, #tpu.memory_space<vmem>>, %arg8: memref<9x4x4xf32, #tpu.memory_space<vmem>>, %arg9: memref<4x1xf32, #tpu.memory_space<vmem>>, %arg10: memref<8x4xf32, #tpu.memory_space<vmem>>, %arg11: memref<8x4xf32, #tpu.memory_space<vmem>>, %arg12: memref<8x1xf32, #tpu.memory_space<vmem>>, %arg13: memref<9x256xf32, #tpu.memory_space<vmem>>, %arg14: memref<1x8x256xf32, #tpu.memory_space<vmem>>) attributes {dimension_semantics = [#tpu.dimension_semantics<parallel>], iteration_bounds = array<i64: 2>, scalar_prefetch = 0 : i64, scratch_operands = 0 : i64, tpu.core_type = #tpu.core_type<tc>, window_params = [{transform_indices = @transform_0, window_bounds = array<i64: 1, 4, 256>}, {pipeline_mode = #tpu.pipeline_mode<synchronous>, transform_indices = @transform_1, window_bounds = array<i64: 4, 4>}, {pipeline_mode = #tpu.pipeline_mode<synchronous>, transform_indices = @transform_2, window_bounds = array<i64: 4, 1>}, {pipeline_mode = #tpu.pipeline_mode<synchronous>, transform_indices = @transform_3, window_bounds = array<i64: 4, 4>}, {pipeline_mode = #tpu.pipeline_mode<synchronous>, transform_indices = @transform_4, window_bounds = array<i64: 4, 1>}, {pipeline_mode = #tpu.pipeline_mode<synchronous>, transform_indices = @transform_5, window_bounds = array<i64: 4, 4>}, {pipeline_mode = #tpu.pipeline_mode<synchronous>, transform_indices = @transform_6, window_bounds = array<i64: 4, 1>}, {pipeline_mode = #tpu.pipeline_mode<synchronous>, transform_indices = @transform_7, window_bounds = array<i64: 9, 4, 4>}, {pipeline_mode = #tpu.pipeline_mode<synchronous>, transform_indices = @transform_8, window_bounds = array<i64: 4, 1>}, {pipeline_mode = #tpu.pipeline_mode<synchronous>, transform_indices = @transform_9, window_bounds = array<i64: 8, 4>}, {pipeline_mode = #tpu.pipeline_mode<synchronous>, transform_indices = @transform_10, window_bounds = array<i64: 8, 4>}, {pipeline_mode = #tpu.pipeline_mode<synchronous>, transform_indices = @transform_11, window_bounds = array<i64: 8, 1>}, {pipeline_mode = #tpu.pipeline_mode<synchronous>, transform_indices = @transform_12, window_bounds = array<i64: 9, 256>}, {transform_indices = @transform_13, window_bounds = array<i64: 1, 8, 256>}]} {
    %c0 = arith.constant 0 : index
    %c0_0 = arith.constant 0 : index
    %c0_1 = arith.constant 0 : index
    %0 = vector.load %arg1[%c0, %c0_0, %c0_1] : memref<1x4x256xf32, #tpu.memory_space<vmem>>, vector<1x4x256xf32>
    %1 = vector.shape_cast %0 : vector<1x4x256xf32> to vector<4x256xf32>
    %c0_2 = arith.constant 0 : index
    %c0_3 = arith.constant 0 : index
    %2 = vector.load %arg2[%c0_2, %c0_3] : memref<4x4xf32, #tpu.memory_space<vmem>>, vector<4x4xf32>
    %cst = arith.constant dense<0.000000e+00> : vector<4x256xf32>
    %3 = tpu.matmul %2, %1, %cst {dimension_numbers = #tpu.dot_dimension_numbers<[1], [0], [0], [1], [0, 0, 1, 1], [], []>} : vector<4x4xf32>, vector<4x256xf32>, vector<4x256xf32> -> vector<4x256xf32>
    %c0_4 = arith.constant 0 : index
    %c0_5 = arith.constant 0 : index
    %4 = vector.load %arg3[%c0_4, %c0_5] : memref<4x1xf32, #tpu.memory_space<vmem>>, vector<4x1xf32>
    %5 = vector.broadcast %4 : vector<4x1xf32> to vector<4x256xf32>
    %6 = arith.addf %3, %5 : vector<4x256xf32>
    %cst_6 = arith.constant 0.000000e+00 : f32
    %7 = vector.broadcast %cst_6 : f32 to vector<4x256xf32>
    %8 = arith.maximumf %6, %7 : vector<4x256xf32>
    %c0_7 = arith.constant 0 : index
    %c0_8 = arith.constant 0 : index
    %9 = vector.load %arg4[%c0_7, %c0_8] : memref<4x4xf32, #tpu.memory_space<vmem>>, vector<4x4xf32>
    %cst_9 = arith.constant dense<0.000000e+00> : vector<4x256xf32>
    %10 = tpu.matmul %9, %1, %cst_9 {dimension_numbers = #tpu.dot_dimension_numbers<[1], [0], [0], [1], [0, 0, 1, 1], [], []>} : vector<4x4xf32>, vector<4x256xf32>, vector<4x256xf32> -> vector<4x256xf32>
    %c0_10 = arith.constant 0 : index
    %c0_11 = arith.constant 0 : index
    %11 = vector.load %arg5[%c0_10, %c0_11] : memref<4x1xf32, #tpu.memory_space<vmem>>, vector<4x1xf32>
    %12 = vector.broadcast %11 : vector<4x1xf32> to vector<4x256xf32>
    %13 = arith.addf %10, %12 : vector<4x256xf32>
    %cst_12 = arith.constant 0.000000e+00 : f32
    %14 = vector.broadcast %cst_12 : f32 to vector<4x256xf32>
    %15 = arith.maximumf %13, %14 : vector<4x256xf32>
    %c0_13 = arith.constant 0 : index
    %c0_14 = arith.constant 0 : index
    %16 = vector.load %arg6[%c0_13, %c0_14] : memref<4x4xf32, #tpu.memory_space<vmem>>, vector<4x4xf32>
    %cst_15 = arith.constant dense<0.000000e+00> : vector<4x256xf32>
    %17 = tpu.matmul %16, %8, %cst_15 {dimension_numbers = #tpu.dot_dimension_numbers<[1], [0], [0], [1], [0, 0, 1, 1], [], []>} : vector<4x4xf32>, vector<4x256xf32>, vector<4x256xf32> -> vector<4x256xf32>
    %c0_16 = arith.constant 0 : index
    %c0_17 = arith.constant 0 : index
    %18 = vector.load %arg7[%c0_16, %c0_17] : memref<4x1xf32, #tpu.memory_space<vmem>>, vector<4x1xf32>
    %19 = vector.broadcast %18 : vector<4x1xf32> to vector<4x256xf32>
    %20 = arith.addf %17, %19 : vector<4x256xf32>
    %cst_18 = arith.constant 0.000000e+00 : f32
    %21 = vector.broadcast %cst_18 : f32 to vector<4x256xf32>
    %22 = arith.maximumf %20, %21 : vector<4x256xf32>
    %cst_19 = arith.constant 0.000000e+00 : f32
    %23 = vector.broadcast %cst_19 : f32 to vector<4x128xf32>
    %24 = tpu.concatenate %23, %22, %23 in 1 : vector<4x128xf32>, vector<4x256xf32>, vector<4x128xf32> -> vector<4x512xf32>
    %cst_20 = arith.constant 0.000000e+00 : f32
    %25 = vector.broadcast %cst_20 : f32 to vector<4x256xf32>
    %26 = vector.extract_strided_slice %24 {offsets = [0, 111], sizes = [4, 256], strides = [1, 1]} : vector<4x512xf32> to vector<4x256xf32>
    %c0_21 = arith.constant 0 : index
    %c0_22 = arith.constant 0 : index
    %27 = vector.load %arg13[%c0_21, %c0_22] : memref<9x256xf32, #tpu.memory_space<vmem>>, vector<1x256xf32>
    %c0_23 = arith.constant 0 : index
    %c0_24 = arith.constant 0 : index
    %c0_25 = arith.constant 0 : index
    %28 = vector.load %arg8[%c0_23, %c0_24, %c0_25] : memref<9x4x4xf32, #tpu.memory_space<vmem>>, vector<1x4x4xf32>
    %29 = vector.shape_cast %28 : vector<1x4x4xf32> to vector<4x4xf32>
    %30 = vector.broadcast %27 : vector<1x256xf32> to vector<4x256xf32>
    %31 = arith.mulf %26, %30 : vector<4x256xf32>
    %cst_26 = arith.constant dense<0.000000e+00> : vector<4x256xf32>
    %32 = tpu.matmul %29, %31, %cst_26 {dimension_numbers = #tpu.dot_dimension_numbers<[1], [0], [0], [1], [0, 0, 1, 1], [], []>} : vector<4x4xf32>, vector<4x256xf32>, vector<4x256xf32> -> vector<4x256xf32>
    %33 = arith.addf %25, %32 : vector<4x256xf32>
    %34 = vector.extract_strided_slice %24 {offsets = [0, 112], sizes = [4, 256], strides = [1, 1]} : vector<4x512xf32> to vector<4x256xf32>
    %c1 = arith.constant 1 : index
    %c0_27 = arith.constant 0 : index
    %35 = vector.load %arg13[%c1, %c0_27] : memref<9x256xf32, #tpu.memory_space<vmem>>, vector<1x256xf32>
    %c1_28 = arith.constant 1 : index
    %c0_29 = arith.constant 0 : index
    %c0_30 = arith.constant 0 : index
    %36 = vector.load %arg8[%c1_28, %c0_29, %c0_30] : memref<9x4x4xf32, #tpu.memory_space<vmem>>, vector<1x4x4xf32>
    %37 = vector.shape_cast %36 : vector<1x4x4xf32> to vector<4x4xf32>
    %38 = vector.broadcast %35 : vector<1x256xf32> to vector<4x256xf32>
    %39 = arith.mulf %34, %38 : vector<4x256xf32>
    %cst_31 = arith.constant dense<0.000000e+00> : vector<4x256xf32>
    %40 = tpu.matmul %37, %39, %cst_31 {dimension_numbers = #tpu.dot_dimension_numbers<[1], [0], [0], [1], [0, 0, 1, 1], [], []>} : vector<4x4xf32>, vector<4x256xf32>, vector<4x256xf32> -> vector<4x256xf32>
    %41 = arith.addf %33, %40 : vector<4x256xf32>
    %42 = vector.extract_strided_slice %24 {offsets = [0, 113], sizes = [4, 256], strides = [1, 1]} : vector<4x512xf32> to vector<4x256xf32>
    %c2 = arith.constant 2 : index
    %c0_32 = arith.constant 0 : index
    %43 = vector.load %arg13[%c2, %c0_32] : memref<9x256xf32, #tpu.memory_space<vmem>>, vector<1x256xf32>
    %c2_33 = arith.constant 2 : index
    %c0_34 = arith.constant 0 : index
    %c0_35 = arith.constant 0 : index
    %44 = vector.load %arg8[%c2_33, %c0_34, %c0_35] : memref<9x4x4xf32, #tpu.memory_space<vmem>>, vector<1x4x4xf32>
    %45 = vector.shape_cast %44 : vector<1x4x4xf32> to vector<4x4xf32>
    %46 = vector.broadcast %43 : vector<1x256xf32> to vector<4x256xf32>
    %47 = arith.mulf %42, %46 : vector<4x256xf32>
    %cst_36 = arith.constant dense<0.000000e+00> : vector<4x256xf32>
    %48 = tpu.matmul %45, %47, %cst_36 {dimension_numbers = #tpu.dot_dimension_numbers<[1], [0], [0], [1], [0, 0, 1, 1], [], []>} : vector<4x4xf32>, vector<4x256xf32>, vector<4x256xf32> -> vector<4x256xf32>
    %49 = arith.addf %41, %48 : vector<4x256xf32>
    %50 = vector.extract_strided_slice %24 {offsets = [0, 127], sizes = [4, 256], strides = [1, 1]} : vector<4x512xf32> to vector<4x256xf32>
    %c3 = arith.constant 3 : index
    %c0_37 = arith.constant 0 : index
    %51 = vector.load %arg13[%c3, %c0_37] : memref<9x256xf32, #tpu.memory_space<vmem>>, vector<1x256xf32>
    %c3_38 = arith.constant 3 : index
    %c0_39 = arith.constant 0 : index
    %c0_40 = arith.constant 0 : index
    %52 = vector.load %arg8[%c3_38, %c0_39, %c0_40] : memref<9x4x4xf32, #tpu.memory_space<vmem>>, vector<1x4x4xf32>
    %53 = vector.shape_cast %52 : vector<1x4x4xf32> to vector<4x4xf32>
    %54 = vector.broadcast %51 : vector<1x256xf32> to vector<4x256xf32>
    %55 = arith.mulf %50, %54 : vector<4x256xf32>
    %cst_41 = arith.constant dense<0.000000e+00> : vector<4x256xf32>
    %56 = tpu.matmul %53, %55, %cst_41 {dimension_numbers = #tpu.dot_dimension_numbers<[1], [0], [0], [1], [0, 0, 1, 1], [], []>} : vector<4x4xf32>, vector<4x256xf32>, vector<4x256xf32> -> vector<4x256xf32>
    %57 = arith.addf %49, %56 : vector<4x256xf32>
    %58 = vector.extract_strided_slice %24 {offsets = [0, 128], sizes = [4, 256], strides = [1, 1]} : vector<4x512xf32> to vector<4x256xf32>
    %c4 = arith.constant 4 : index
    %c0_42 = arith.constant 0 : index
    %59 = vector.load %arg13[%c4, %c0_42] : memref<9x256xf32, #tpu.memory_space<vmem>>, vector<1x256xf32>
    %c4_43 = arith.constant 4 : index
    %c0_44 = arith.constant 0 : index
    %c0_45 = arith.constant 0 : index
    %60 = vector.load %arg8[%c4_43, %c0_44, %c0_45] : memref<9x4x4xf32, #tpu.memory_space<vmem>>, vector<1x4x4xf32>
    %61 = vector.shape_cast %60 : vector<1x4x4xf32> to vector<4x4xf32>
    %62 = vector.broadcast %59 : vector<1x256xf32> to vector<4x256xf32>
    %63 = arith.mulf %58, %62 : vector<4x256xf32>
    %cst_46 = arith.constant dense<0.000000e+00> : vector<4x256xf32>
    %64 = tpu.matmul %61, %63, %cst_46 {dimension_numbers = #tpu.dot_dimension_numbers<[1], [0], [0], [1], [0, 0, 1, 1], [], []>} : vector<4x4xf32>, vector<4x256xf32>, vector<4x256xf32> -> vector<4x256xf32>
    %65 = arith.addf %57, %64 : vector<4x256xf32>
    %66 = vector.extract_strided_slice %24 {offsets = [0, 129], sizes = [4, 256], strides = [1, 1]} : vector<4x512xf32> to vector<4x256xf32>
    %c5 = arith.constant 5 : index
    %c0_47 = arith.constant 0 : index
    %67 = vector.load %arg13[%c5, %c0_47] : memref<9x256xf32, #tpu.memory_space<vmem>>, vector<1x256xf32>
    %c5_48 = arith.constant 5 : index
    %c0_49 = arith.constant 0 : index
    %c0_50 = arith.constant 0 : index
    %68 = vector.load %arg8[%c5_48, %c0_49, %c0_50] : memref<9x4x4xf32, #tpu.memory_space<vmem>>, vector<1x4x4xf32>
    %69 = vector.shape_cast %68 : vector<1x4x4xf32> to vector<4x4xf32>
    %70 = vector.broadcast %67 : vector<1x256xf32> to vector<4x256xf32>
    %71 = arith.mulf %66, %70 : vector<4x256xf32>
    %cst_51 = arith.constant dense<0.000000e+00> : vector<4x256xf32>
    %72 = tpu.matmul %69, %71, %cst_51 {dimension_numbers = #tpu.dot_dimension_numbers<[1], [0], [0], [1], [0, 0, 1, 1], [], []>} : vector<4x4xf32>, vector<4x256xf32>, vector<4x256xf32> -> vector<4x256xf32>
    %73 = arith.addf %65, %72 : vector<4x256xf32>
    %74 = vector.extract_strided_slice %24 {offsets = [0, 143], sizes = [4, 256], strides = [1, 1]} : vector<4x512xf32> to vector<4x256xf32>
    %c6 = arith.constant 6 : index
    %c0_52 = arith.constant 0 : index
    %75 = vector.load %arg13[%c6, %c0_52] : memref<9x256xf32, #tpu.memory_space<vmem>>, vector<1x256xf32>
    %c6_53 = arith.constant 6 : index
    %c0_54 = arith.constant 0 : index
    %c0_55 = arith.constant 0 : index
    %76 = vector.load %arg8[%c6_53, %c0_54, %c0_55] : memref<9x4x4xf32, #tpu.memory_space<vmem>>, vector<1x4x4xf32>
    %77 = vector.shape_cast %76 : vector<1x4x4xf32> to vector<4x4xf32>
    %78 = vector.broadcast %75 : vector<1x256xf32> to vector<4x256xf32>
    %79 = arith.mulf %74, %78 : vector<4x256xf32>
    %cst_56 = arith.constant dense<0.000000e+00> : vector<4x256xf32>
    %80 = tpu.matmul %77, %79, %cst_56 {dimension_numbers = #tpu.dot_dimension_numbers<[1], [0], [0], [1], [0, 0, 1, 1], [], []>} : vector<4x4xf32>, vector<4x256xf32>, vector<4x256xf32> -> vector<4x256xf32>
    %81 = arith.addf %73, %80 : vector<4x256xf32>
    %82 = vector.extract_strided_slice %24 {offsets = [0, 144], sizes = [4, 256], strides = [1, 1]} : vector<4x512xf32> to vector<4x256xf32>
    %c7 = arith.constant 7 : index
    %c0_57 = arith.constant 0 : index
    %83 = vector.load %arg13[%c7, %c0_57] : memref<9x256xf32, #tpu.memory_space<vmem>>, vector<1x256xf32>
    %c7_58 = arith.constant 7 : index
    %c0_59 = arith.constant 0 : index
    %c0_60 = arith.constant 0 : index
    %84 = vector.load %arg8[%c7_58, %c0_59, %c0_60] : memref<9x4x4xf32, #tpu.memory_space<vmem>>, vector<1x4x4xf32>
    %85 = vector.shape_cast %84 : vector<1x4x4xf32> to vector<4x4xf32>
    %86 = vector.broadcast %83 : vector<1x256xf32> to vector<4x256xf32>
    %87 = arith.mulf %82, %86 : vector<4x256xf32>
    %cst_61 = arith.constant dense<0.000000e+00> : vector<4x256xf32>
    %88 = tpu.matmul %85, %87, %cst_61 {dimension_numbers = #tpu.dot_dimension_numbers<[1], [0], [0], [1], [0, 0, 1, 1], [], []>} : vector<4x4xf32>, vector<4x256xf32>, vector<4x256xf32> -> vector<4x256xf32>
    %89 = arith.addf %81, %88 : vector<4x256xf32>
    %90 = vector.extract_strided_slice %24 {offsets = [0, 145], sizes = [4, 256], strides = [1, 1]} : vector<4x512xf32> to vector<4x256xf32>
    %c8 = arith.constant 8 : index
    %c0_62 = arith.constant 0 : index
    %91 = vector.load %arg13[%c8, %c0_62] : memref<9x256xf32, #tpu.memory_space<vmem>>, vector<1x256xf32>
    %c8_63 = arith.constant 8 : index
    %c0_64 = arith.constant 0 : index
    %c0_65 = arith.constant 0 : index
    %92 = vector.load %arg8[%c8_63, %c0_64, %c0_65] : memref<9x4x4xf32, #tpu.memory_space<vmem>>, vector<1x4x4xf32>
    %93 = vector.shape_cast %92 : vector<1x4x4xf32> to vector<4x4xf32>
    %94 = vector.broadcast %91 : vector<1x256xf32> to vector<4x256xf32>
    %95 = arith.mulf %90, %94 : vector<4x256xf32>
    %cst_66 = arith.constant dense<0.000000e+00> : vector<4x256xf32>
    %96 = tpu.matmul %93, %95, %cst_66 {dimension_numbers = #tpu.dot_dimension_numbers<[1], [0], [0], [1], [0, 0, 1, 1], [], []>} : vector<4x4xf32>, vector<4x256xf32>, vector<4x256xf32> -> vector<4x256xf32>
    %97 = arith.addf %89, %96 : vector<4x256xf32>
    %c0_67 = arith.constant 0 : index
    %c0_68 = arith.constant 0 : index
    %98 = vector.load %arg9[%c0_67, %c0_68] : memref<4x1xf32, #tpu.memory_space<vmem>>, vector<4x1xf32>
    %99 = vector.broadcast %98 : vector<4x1xf32> to vector<4x256xf32>
    %100 = arith.addf %97, %99 : vector<4x256xf32>
    %cst_69 = arith.constant 0.000000e+00 : f32
    %101 = vector.broadcast %cst_69 : f32 to vector<4x256xf32>
    %102 = arith.maximumf %100, %101 : vector<4x256xf32>
    %103 = arith.addf %8, %102 : vector<4x256xf32>
    %c0_70 = arith.constant 0 : index
    %c0_71 = arith.constant 0 : index
    %104 = vector.load %arg10[%c0_70, %c0_71] : memref<8x4xf32, #tpu.memory_space<vmem>>, vector<8x4xf32>
    %cst_72 = arith.constant dense<0.000000e+00> : vector<8x256xf32>
    %105 = tpu.matmul %104, %103, %cst_72 {dimension_numbers = #tpu.dot_dimension_numbers<[1], [0], [0], [1], [0, 0, 1, 1], [], []>} : vector<8x4xf32>, vector<4x256xf32>, vector<8x256xf32> -> vector<8x256xf32>
    %c0_73 = arith.constant 0 : index
    %c0_74 = arith.constant 0 : index
    %106 = vector.load %arg11[%c0_73, %c0_74] : memref<8x4xf32, #tpu.memory_space<vmem>>, vector<8x4xf32>
    %cst_75 = arith.constant dense<0.000000e+00> : vector<8x256xf32>
    %107 = tpu.matmul %106, %15, %cst_75 {dimension_numbers = #tpu.dot_dimension_numbers<[1], [0], [0], [1], [0, 0, 1, 1], [], []>} : vector<8x4xf32>, vector<4x256xf32>, vector<8x256xf32> -> vector<8x256xf32>
    %108 = arith.addf %105, %107 : vector<8x256xf32>
    %c0_76 = arith.constant 0 : index
    %c0_77 = arith.constant 0 : index
    %109 = vector.load %arg12[%c0_76, %c0_77] : memref<8x1xf32, #tpu.memory_space<vmem>>, vector<8x1xf32>
    %110 = vector.broadcast %109 : vector<8x1xf32> to vector<8x256xf32>
    %111 = arith.addf %108, %110 : vector<8x256xf32>
    %cst_78 = arith.constant 0.000000e+00 : f32
    %112 = vector.broadcast %cst_78 : f32 to vector<8x256xf32>
    %113 = arith.maximumf %111, %112 : vector<8x256xf32>
    %c0_79 = arith.constant 0 : index
    %c0_80 = arith.constant 0 : index
    %c0_81 = arith.constant 0 : index
    %114 = vector.load %arg14[%c0_79, %c0_80, %c0_81] : memref<1x8x256xf32, #tpu.memory_space<vmem>>, vector<1x8x256xf32>
    %115 = vector.shape_cast %114 : vector<1x8x256xf32> to vector<8x256xf32>
    %116 = vector.shape_cast %113 : vector<8x256xf32> to vector<1x8x256xf32>
    tpu.vector_store %arg14[%c0_79, %c0_80, %c0_81], %116 {strides = array<i32>} : memref<1x8x256xf32, #tpu.memory_space<vmem>>, vector<1x8x256xf32>,
    return
  }
  func.func @transform_0(%arg0: i32) -> (i32, i32, i32) {
    %c0_i32 = arith.constant 0 : i32
    %c0_i32_0 = arith.constant 0 : i32
    %c0_i32_1 = arith.constant 0 : i32
    return %arg0, %c0_i32, %c0_i32_0 : i32, i32, i32
  }
  func.func @transform_1(%arg0: i32) -> (i32, i32) {
    %c0_i32 = arith.constant 0 : i32
    %c0_i32_0 = arith.constant 0 : i32
    %c0_i32_1 = arith.constant 0 : i32
    return %c0_i32, %c0_i32_0 : i32, i32
  }
  func.func @transform_2(%arg0: i32) -> (i32, i32) {
    %c0_i32 = arith.constant 0 : i32
    %c0_i32_0 = arith.constant 0 : i32
    %c0_i32_1 = arith.constant 0 : i32
    return %c0_i32, %c0_i32_0 : i32, i32
  }
  func.func @transform_3(%arg0: i32) -> (i32, i32) {
    %c0_i32 = arith.constant 0 : i32
    %c0_i32_0 = arith.constant 0 : i32
    %c0_i32_1 = arith.constant 0 : i32
    return %c0_i32, %c0_i32_0 : i32, i32
  }
  func.func @transform_4(%arg0: i32) -> (i32, i32) {
    %c0_i32 = arith.constant 0 : i32
    %c0_i32_0 = arith.constant 0 : i32
    %c0_i32_1 = arith.constant 0 : i32
    return %c0_i32, %c0_i32_0 : i32, i32
  }
  func.func @transform_5(%arg0: i32) -> (i32, i32) {
    %c0_i32 = arith.constant 0 : i32
    %c0_i32_0 = arith.constant 0 : i32
    %c0_i32_1 = arith.constant 0 : i32
    return %c0_i32, %c0_i32_0 : i32, i32
  }
  func.func @transform_6(%arg0: i32) -> (i32, i32) {
    %c0_i32 = arith.constant 0 : i32
    %c0_i32_0 = arith.constant 0 : i32
    %c0_i32_1 = arith.constant 0 : i32
    return %c0_i32, %c0_i32_0 : i32, i32
  }
  func.func @transform_7(%arg0: i32) -> (i32, i32, i32) {
    %c0_i32 = arith.constant 0 : i32
    %c0_i32_0 = arith.constant 0 : i32
    %c0_i32_1 = arith.constant 0 : i32
    %c0_i32_2 = arith.constant 0 : i32
    return %c0_i32, %c0_i32_0, %c0_i32_1 : i32, i32, i32
  }
  func.func @transform_8(%arg0: i32) -> (i32, i32) {
    %c0_i32 = arith.constant 0 : i32
    %c0_i32_0 = arith.constant 0 : i32
    %c0_i32_1 = arith.constant 0 : i32
    return %c0_i32, %c0_i32_0 : i32, i32
  }
  func.func @transform_9(%arg0: i32) -> (i32, i32) {
    %c0_i32 = arith.constant 0 : i32
    %c0_i32_0 = arith.constant 0 : i32
    %c0_i32_1 = arith.constant 0 : i32
    return %c0_i32, %c0_i32_0 : i32, i32
  }
  func.func @transform_10(%arg0: i32) -> (i32, i32) {
    %c0_i32 = arith.constant 0 : i32
    %c0_i32_0 = arith.constant 0 : i32
    %c0_i32_1 = arith.constant 0 : i32
    return %c0_i32, %c0_i32_0 : i32, i32
  }
  func.func @transform_11(%arg0: i32) -> (i32, i32) {
    %c0_i32 = arith.constant 0 : i32
    %c0_i32_0 = arith.constant 0 : i32
    %c0_i32_1 = arith.constant 0 : i32
    return %c0_i32, %c0_i32_0 : i32, i32
  }
  func.func @transform_12(%arg0: i32) -> (i32, i32) {
    %c0_i32 = arith.constant 0 : i32
    %c0_i32_0 = arith.constant 0 : i32
    %c0_i32_1 = arith.constant 0 : i32
    return %c0_i32, %c0_i32_0 : i32, i32
  }
  func.func @transform_13(%arg0: i32) -> (i32, i32, i32) {
    %c0_i32 = arith.constant 0 : i32
    %c0_i32_0 = arith.constant 0 : i32
    %c0_i32_1 = arith.constant 0 : i32
    return %arg0, %c0_i32, %c0_i32_0 : i32, i32, i32
  }
}

</mosaic_0001>

<llo_original>
// kernel: c3_forward.1
$region0: #{c3_forward.1}
  #allocation0 [shape = 'u32[]', space=smem, size = 0x4, offset = 0x4, fixed_abs, tag = 'smem constant byte address 0x4 - core index']
  #allocation1 [shape = 'u32[144,128]{1,0:T(1,128)}', space=vmem, size = 0x12000, scoped, tag = 'internal scratch']
  %s0 = inlined_call_operand.vmem [shape: f32[2,4,256], index: 0, kind: input, shape index: {}]
  %s1 = inlined_call_operand.vmem [shape: f32[4,4], index: 1, kind: input, shape index: {}]
  %s2 = inlined_call_operand.vmem [shape: f32[4,1], index: 2, kind: input, shape index: {}]
  %s3 = inlined_call_operand.vmem [shape: f32[4,4], index: 3, kind: input, shape index: {}]
  %s4 = inlined_call_operand.vmem [shape: f32[4,1], index: 4, kind: input, shape index: {}]
  %s5 = inlined_call_operand.vmem [shape: f32[4,4], index: 5, kind: input, shape index: {}]
  %s6 = inlined_call_operand.vmem [shape: f32[4,1], index: 6, kind: input, shape index: {}]
  %s7 = inlined_call_operand.vmem [shape: f32[9,4,4], index: 7, kind: input, shape index: {}]
  %s8 = inlined_call_operand.vmem [shape: f32[4,1], index: 8, kind: input, shape index: {}]
  %s9 = inlined_call_operand.vmem [shape: f32[8,4], index: 9, kind: input, shape index: {}]
  %s10 = inlined_call_operand.vmem [shape: f32[8,4], index: 10, kind: input, shape index: {}]
  %s11 = inlined_call_operand.vmem [shape: f32[8,1], index: 11, kind: input, shape index: {}]
  %s12 = inlined_call_operand.vmem [shape: f32[9,256], index: 12, kind: input, shape index: {}]
  %s13 = inlined_call_operand.vmem [shape: f32[2,8,256], index: 13, kind: output, shape index: {}]
  %s14 = sld [smem:[#allocation0]]
  $region85: #{c3_forward.1} parent=0
    _
  %s16 = ssub.s32 1, %s14
  %s17 = scalar_select 0, %s16, %s14
  loop: start=0, step=1, limit=4
  $region2: #{c3_forward.1} parent=0 // loop_pre_header
    _
  $region3: #{c3_forward.1} parent=0 // loop_header
    %s19 = sphi 0, %s23
    %p20 = scmp.ge.s32.totalorder %s19, 4
    %s29 = sphi 0, %s31
    %s32 = sphi 0, %s29
    %s33 = sphi 0, %s32
    %s49 = sphi 0, %s33
    %s53 = sphi 0, %s53
    %s55 = sphi 0, %s53
    %s56 = sphi 0, %s55
    %s70 = sphi 0, %s56
    %s74 = sphi 0, %s74
    %s76 = sphi 0, %s74
    %s77 = sphi 0, %s76
    %s91 = sphi 0, %s77
    %s95 = sphi 0, %s95
    %s97 = sphi 0, %s95
    %s98 = sphi 0, %s97
    %s112 = sphi 0, %s98
    %s116 = sphi 0, %s116
    %s118 = sphi 0, %s116
    %s119 = sphi 0, %s118
    %s133 = sphi 0, %s119
    %s137 = sphi 0, %s137
    %s139 = sphi 0, %s137
    %s140 = sphi 0, %s139
    %s154 = sphi 0, %s140
    %s158 = sphi 0, %s158
    %s160 = sphi 0, %s158
    %s161 = sphi 0, %s160
    %s175 = sphi 0, %s161
    %s179 = sphi 0, %s179
    %s181 = sphi 0, %s179
    %s182 = sphi 0, %s181
    %s196 = sphi 0, %s182
    %s200 = sphi 0, %s200
    %s202 = sphi 0, %s200
    %s203 = sphi 0, %s202
    %s217 = sphi 0, %s203
    %s221 = sphi 0, %s221
    %s223 = sphi 0, %s221
    %s224 = sphi 0, %s223
    %s238 = sphi 0, %s224
    %s242 = sphi 0, %s242
    %s244 = sphi 0, %s242
    %s245 = sphi 0, %s244
    %s259 = sphi 0, %s245
    %s263 = sphi 0, %s263
    %s265 = sphi 0, %s263
    %s266 = sphi 0, %s265
    %s280 = sphi 0, %s266
    %s284 = sphi 0, %s284
    %s286 = sphi 0, %s284
    %s287 = sphi 0, %s286
    %s301 = sphi 0, %s287
    %s307 = sphi 0, %s309
    %s310 = sphi 0, %s307
    %s311 = sphi 0, %s310
    %s327 = sphi 0, %s311
  $region4: #{c3_forward.1} parent=0 // loop_header_branch
    %22 = sbr.rel (%p20) target = $region8
  $region5: #{c3_forward.1} parent=0 // loop_body
    %s24 = ssub.s32 %s19, 1
    %s25 = ssub.s32 %s19, 2
    %s26 = sadd.s32 %s19, 1
    %s27 = ssub.s32 %s19, %s26
    %p28 = scmp.eq.s32.totalorder %s27, 0
    %s30 = sadd.s32 %s29, 1
    %s31 = scalar_select %p28, %s29, %s30
    %p34 = pneg %p28
    %p35 = scmp.eq.s32.totalorder %s19, 1
    %p36 = por %p34, %p35
    %p37 = scmp.ne.s32.totalorder %s29, %s32
    %p38 = scmp.eq.s32.totalorder %s19, 0
    %p39 = por %p37, %p38
    %p40 = scmp.ne.s32.totalorder %s29, %s32
    %p41 = scmp.eq.s32.totalorder %s24, 1
    %p42 = por %p40, %p41
    %p43 = scmp.ne.s32.totalorder %s32, %s33
    %p44 = scmp.eq.s32.totalorder %s24, 0
    %p45 = por %p43, %p44
    %p46 = scmp.ne.s32.totalorder %s32, %s33
    %p47 = scmp.eq.s32.totalorder %s25, 1
    %p48 = por %p46, %p47
    %p50 = scmp.ne.s32.totalorder %s33, %s49
    %p51 = scmp.eq.s32.totalorder %s25, 0
    %p52 = por %p50, %p51
    %s54 = sadd.s32 %s53, 1
    %p57 = scmp.eq.s32.totalorder %s19, 1
    %p58 = scmp.ne.s32.totalorder %s53, %s55
    %p59 = scmp.eq.s32.totalorder %s19, 0
    %p60 = por %p58, %p59
    %p61 = scmp.ne.s32.totalorder %s53, %s55
    %p62 = scmp.eq.s32.totalorder %s24, 1
    %p63 = por %p61, %p62
    %p64 = scmp.ne.s32.totalorder %s55, %s56
    %p65 = scmp.eq.s32.totalorder %s24, 0
    %p66 = por %p64, %p65
    %p67 = scmp.ne.s32.totalorder %s55, %s56
    %p68 = scmp.eq.s32.totalorder %s25, 1
    %p69 = por %p67, %p68
    %p71 = scmp.ne.s32.totalorder %s56, %s70
    %p72 = scmp.eq.s32.totalorder %s25, 0
    %p73 = por %p71, %p72
    %s75 = sadd.s32 %s74, 1
    %p78 = scmp.eq.s32.totalorder %s19, 1
    %p79 = scmp.ne.s32.totalorder %s74, %s76
    %p80 = scmp.eq.s32.totalorder %s19, 0
    %p81 = por %p79, %p80
    %p82 = scmp.ne.s32.totalorder %s74, %s76
    %p83 = scmp.eq.s32.totalorder %s24, 1
    %p84 = por %p82, %p83
    %p85 = scmp.ne.s32.totalorder %s76, %s77
    %p86 = scmp.eq.s32.totalorder %s24, 0
    %p87 = por %p85, %p86
    %p88 = scmp.ne.s32.totalorder %s76, %s77
    %p89 = scmp.eq.s32.totalorder %s25, 1
    %p90 = por %p88, %p89
    %p92 = scmp.ne.s32.totalorder %s77, %s91
    %p93 = scmp.eq.s32.totalorder %s25, 0
    %p94 = por %p92, %p93
    %s96 = sadd.s32 %s95, 1
    %p99 = scmp.eq.s32.totalorder %s19, 1
    %p100 = scmp.ne.s32.totalorder %s95, %s97
    %p101 = scmp.eq.s32.totalorder %s19, 0
    %p102 = por %p100, %p101
    %p103 = scmp.ne.s32.totalorder %s95, %s97
    %p104 = scmp.eq.s32.totalorder %s24, 1
    %p105 = por %p103, %p104
    %p106 = scmp.ne.s32.totalorder %s97, %s98
    %p107 = scmp.eq.s32.totalorder %s24, 0
    %p108 = por %p106, %p107
    %p109 = scmp.ne.s32.totalorder %s97, %s98
    %p110 = scmp.eq.s32.totalorder %s25, 1
    %p111 = por %p109, %p110
    %p113 = scmp.ne.s32.totalorder %s98, %s112
    %p114 = scmp.eq.s32.totalorder %s25, 0
    %p115 = por %p113, %p114
    %s117 = sadd.s32 %s116, 1
    %p120 = scmp.eq.s32.totalorder %s19, 1
    %p121 = scmp.ne.s32.totalorder %s116, %s118
    %p122 = scmp.eq.s32.totalorder %s19, 0
    %p123 = por %p121, %p122
    %p124 = scmp.ne.s32.totalorder %s116, %s118
    %p125 = scmp.eq.s32.totalorder %s24, 1
    %p126 = por %p124, %p125
    %p127 = scmp.ne.s32.totalorder %s118, %s119
    %p128 = scmp.eq.s32.totalorder %s24, 0
    %p129 = por %p127, %p128
    %p130 = scmp.ne.s32.totalorder %s118, %s119
    %p131 = scmp.eq.s32.totalorder %s25, 1
    %p132 = por %p130, %p131
    %p134 = scmp.ne.s32.totalorder %s119, %s133
    %p135 = scmp.eq.s32.totalorder %s25, 0
    %p136 = por %p134, %p135
    %s138 = sadd.s32 %s137, 1
    %p141 = scmp.eq.s32.totalorder %s19, 1
    %p142 = scmp.ne.s32.totalorder %s137, %s139
    %p143 = scmp.eq.s32.totalorder %s19, 0
    %p144 = por %p142, %p143
    %p145 = scmp.ne.s32.totalorder %s137, %s139
    %p146 = scmp.eq.s32.totalorder %s24, 1
    %p147 = por %p145, %p146
    %p148 = scmp.ne.s32.totalorder %s139, %s140
    %p149 = scmp.eq.s32.totalorder %s24, 0
    %p150 = por %p148, %p149
    %p151 = scmp.ne.s32.totalorder %s139, %s140
    %p152 = scmp.eq.s32.totalorder %s25, 1
    %p153 = por %p151, %p152
    %p155 = scmp.ne.s32.totalorder %s140, %s154
    %p156 = scmp.eq.s32.totalorder %s25, 0
    %p157 = por %p155, %p156
    %s159 = sadd.s32 %s158, 1
    %p162 = scmp.eq.s32.totalorder %s19, 1
    %p163 = scmp.ne.s32.totalorder %s158, %s160
    %p164 = scmp.eq.s32.totalorder %s19, 0
    %p165 = por %p163, %p164
    %p166 = scmp.ne.s32.totalorder %s158, %s160
    %p167 = scmp.eq.s32.totalorder %s24, 1
    %p168 = por %p166, %p167
    %p169 = scmp.ne.s32.totalorder %s160, %s161
    %p170 = scmp.eq.s32.totalorder %s24, 0
    %p171 = por %p169, %p170
    %p172 = scmp.ne.s32.totalorder %s160, %s161
    %p173 = scmp.eq.s32.totalorder %s25, 1
    %p174 = por %p172, %p173
    %p176 = scmp.ne.s32.totalorder %s161, %s175
    %p177 = scmp.eq.s32.totalorder %s25, 0
    %p178 = por %p176, %p177
    %s180 = sadd.s32 %s179, 1
    %p183 = scmp.eq.s32.totalorder %s19, 1
    %p184 = scmp.ne.s32.totalorder %s179, %s181
    %p185 = scmp.eq.s32.totalorder %s19, 0
    %p186 = por %p184, %p185
    %p187 = scmp.ne.s32.totalorder %s179, %s181
    %p188 = scmp.eq.s32.totalorder %s24, 1
    %p189 = por %p187, %p188
    %p190 = scmp.ne.s32.totalorder %s181, %s182
    %p191 = scmp.eq.s32.totalorder %s24, 0
    %p192 = por %p190, %p191
    %p193 = scmp.ne.s32.totalorder %s181, %s182
    %p194 = scmp.eq.s32.totalorder %s25, 1
    %p195 = por %p193, %p194
    %p197 = scmp.ne.s32.totalorder %s182, %s196
    %p198 = scmp.eq.s32.totalorder %s25, 0
    %p199 = por %p197, %p198
    %s201 = sadd.s32 %s200, 1
    %p204 = scmp.eq.s32.totalorder %s19, 1
    %p205 = scmp.ne.s32.totalorder %s200, %s202
    %p206 = scmp.eq.s32.totalorder %s19, 0
    %p207 = por %p205, %p206
    %p208 = scmp.ne.s32.totalorder %s200, %s202
    %p209 = scmp.eq.s32.totalorder %s24, 1
    %p210 = por %p208, %p209
    %p211 = scmp.ne.s32.totalorder %s202, %s203
    %p212 = scmp.eq.s32.totalorder %s24, 0
    %p213 = por %p211, %p212
    %p214 = scmp.ne.s32.totalorder %s202, %s203
    %p215 = scmp.eq.s32.totalorder %s25, 1
    %p216 = por %p214, %p215
    %p218 = scmp.ne.s32.totalorder %s203, %s217
    %p219 = scmp.eq.s32.totalorder %s25, 0
    %p220 = por %p218, %p219
    %s222 = sadd.s32 %s221, 1
    %p225 = scmp.eq.s32.totalorder %s19, 1
    %p226 = scmp.ne.s32.totalorder %s221, %s223
    %p227 = scmp.eq.s32.totalorder %s19, 0
    %p228 = por %p226, %p227
    %p229 = scmp.ne.s32.totalorder %s221, %s223
    %p230 = scmp.eq.s32.totalorder %s24, 1
    %p231 = por %p229, %p230
    %p232 = scmp.ne.s32.totalorder %s223, %s224
    %p233 = scmp.eq.s32.totalorder %s24, 0
    %p234 = por %p232, %p233
    %p235 = scmp.ne.s32.totalorder %s223, %s224
    %p236 = scmp.eq.s32.totalorder %s25, 1
    %p237 = por %p235, %p236
    %p239 = scmp.ne.s32.totalorder %s224, %s238
    %p240 = scmp.eq.s32.totalorder %s25, 0
    %p241 = por %p239, %p240
    %s243 = sadd.s32 %s242, 1
    %p246 = scmp.eq.s32.totalorder %s19, 1
    %p247 = scmp.ne.s32.totalorder %s242, %s244
    %p248 = scmp.eq.s32.totalorder %s19, 0
    %p249 = por %p247, %p248
    %p250 = scmp.ne.s32.totalorder %s242, %s244
    %p251 = scmp.eq.s32.totalorder %s24, 1
    %p252 = por %p250, %p251
    %p253 = scmp.ne.s32.totalorder %s244, %s245
    %p254 = scmp.eq.s32.totalorder %s24, 0
    %p255 = por %p253, %p254
    %p256 = scmp.ne.s32.totalorder %s244, %s245
    %p257 = scmp.eq.s32.totalorder %s25, 1
    %p258 = por %p256, %p257
    %p260 = scmp.ne.s32.totalorder %s245, %s259
    %p261 = scmp.eq.s32.totalorder %s25, 0
    %p262 = por %p260, %p261
    %s264 = sadd.s32 %s263, 1
    %p267 = scmp.eq.s32.totalorder %s19, 1
    %p268 = scmp.ne.s32.totalorder %s263, %s265
    %p269 = scmp.eq.s32.totalorder %s19, 0
    %p270 = por %p268, %p269
    %p271 = scmp.ne.s32.totalorder %s263, %s265
    %p272 = scmp.eq.s32.totalorder %s24, 1
    %p273 = por %p271, %p272
    %p274 = scmp.ne.s32.totalorder %s265, %s266
    %p275 = scmp.eq.s32.totalorder %s24, 0
    %p276 = por %p274, %p275
    %p277 = scmp.ne.s32.totalorder %s265, %s266
    %p278 = scmp.eq.s32.totalorder %s25, 1
    %p279 = por %p277, %p278
    %p281 = scmp.ne.s32.totalorder %s266, %s280
    %p282 = scmp.eq.s32.totalorder %s25, 0
    %p283 = por %p281, %p282
    %s285 = sadd.s32 %s284, 1
    %p288 = scmp.eq.s32.totalorder %s19, 1
    %p289 = scmp.ne.s32.totalorder %s284, %s286
    %p290 = scmp.eq.s32.totalorder %s19, 0
    %p291 = por %p289, %p290
    %p292 = scmp.ne.s32.totalorder %s284, %s286
    %p293 = scmp.eq.s32.totalorder %s24, 1
    %p294 = por %p292, %p293
    %p295 = scmp.ne.s32.totalorder %s286, %s287
    %p296 = scmp.eq.s32.totalorder %s24, 0
    %p297 = por %p295, %p296
    %p298 = scmp.ne.s32.totalorder %s286, %s287
    %p299 = scmp.eq.s32.totalorder %s25, 1
    %p300 = por %p298, %p299
    %p302 = scmp.ne.s32.totalorder %s287, %s301
    %p303 = scmp.eq.s32.totalorder %s25, 0
    %p304 = por %p302, %p303
    %s305 = ssub.s32 %s19, %s26
    %p306 = scmp.eq.s32.totalorder %s305, 0
    %s308 = sadd.s32 %s307, 1
    %s309 = scalar_select %p306, %s307, %s308
    %p312 = pneg %p306
    %p313 = scmp.eq.s32.totalorder %s19, 1
    %p314 = por %p312, %p313
    %p315 = scmp.ne.s32.totalorder %s307, %s310
    %p316 = scmp.eq.s32.totalorder %s19, 0
    %p317 = por %p315, %p316
    %p318 = scmp.ne.s32.totalorder %s307, %s310
    %p319 = scmp.eq.s32.totalorder %s24, 1
    %p320 = por %p318, %p319
    %p321 = scmp.ne.s32.totalorder %s310, %s311
    %p322 = scmp.eq.s32.totalorder %s24, 0
    %p323 = por %p321, %p322
    %p324 = scmp.ne.s32.totalorder %s310, %s311
    %p325 = scmp.eq.s32.totalorder %s25, 1
    %p326 = por %p324, %p325
    %p328 = scmp.ne.s32.totalorder %s311, %s327
    %p329 = scmp.eq.s32.totalorder %s25, 0
    %p330 = por %p328, %p329
    %p331 = scmp.le.s32.totalorder 1, %s19
    %p332 = scmp.lt.s32.totalorder %s19, 3
    %p333 = pnand %p331, %p332
    %p334 = pneg %p333
    // Predicated region
    $region9: #{c3_forward.1} parent=5 // pred_check
      _
    $region10: #{c3_forward.1} parent=5 // pred_check_branch
      %336 = sbr.rel (%p333) target = $region12
    $region11: #{c3_forward.1} parent=5 // pred_region
      %s337 = ssub.s32 %s19, 1
      // Predicated region
      $region13: #{c3_forward.1} parent=11 // pred_check
        %p338 = pneg %p66
      $region14: #{c3_forward.1} parent=11 // pred_check_branch
        %340 = sbr.rel (%p338) target = $region16
      $region15: #{c3_forward.1} parent=11 // pred_region
        _
      $region16: #{c3_forward.1} parent=11 // pred_fallthru
        _
      // Predicated region
      $region17: #{c3_forward.1} parent=11 // pred_check
        %p341 = pneg %p87
      $region18: #{c3_forward.1} parent=11 // pred_check_branch
        %343 = sbr.rel (%p341) target = $region20
      $region19: #{c3_forward.1} parent=11 // pred_region
        _
      $region20: #{c3_forward.1} parent=11 // pred_fallthru
        _
      // Predicated region
      $region21: #{c3_forward.1} parent=11 // pred_check
        %p344 = pneg %p108
      $region22: #{c3_forward.1} parent=11 // pred_check_branch
        %346 = sbr.rel (%p344) target = $region24
      $region23: #{c3_forward.1} parent=11 // pred_region
        _
      $region24: #{c3_forward.1} parent=11 // pred_fallthru
        _
      // Predicated region
      $region25: #{c3_forward.1} parent=11 // pred_check
        %p347 = pneg %p129
      $region26: #{c3_forward.1} parent=11 // pred_check_branch
        %349 = sbr.rel (%p347) target = $region28
      $region27: #{c3_forward.1} parent=11 // pred_region
        _
      $region28: #{c3_forward.1} parent=11 // pred_fallthru
        _
      // Predicated region
      $region29: #{c3_forward.1} parent=11 // pred_check
        %p350 = pneg %p150
      $region30: #{c3_forward.1} parent=11 // pred_check_branch
        %352 = sbr.rel (%p350) target = $region32
      $region31: #{c3_forward.1} parent=11 // pred_region
        _
      $region32: #{c3_forward.1} parent=11 // pred_fallthru
        _
      // Predicated region
      $region33: #{c3_forward.1} parent=11 // pred_check
        %p353 = pneg %p171
      $region34: #{c3_forward.1} parent=11 // pred_check_branch
        %355 = sbr.rel (%p353) target = $region36
      $region35: #{c3_forward.1} parent=11 // pred_region
        _
      $region36: #{c3_forward.1} parent=11 // pred_fallthru
        _
      // Predicated region
      $region37: #{c3_forward.1} parent=11 // pred_check
        %p356 = pneg %p192
      $region38: #{c3_forward.1} parent=11 // pred_check_branch
        %358 = sbr.rel (%p356) target = $region40
      $region39: #{c3_forward.1} parent=11 // pred_region
        _
      $region40: #{c3_forward.1} parent=11 // pred_fallthru
        _
      // Predicated region
      $region41: #{c3_forward.1} parent=11 // pred_check
        %p359 = pneg %p213
      $region42: #{c3_forward.1} parent=11 // pred_check_branch
        %361 = sbr.rel (%p359) target = $region44
      $region43: #{c3_forward.1} parent=11 // pred_region
        _
      $region44: #{c3_forward.1} parent=11 // pred_fallthru
        _
      // Predicated region
      $region45: #{c3_forward.1} parent=11 // pred_check
        %p362 = pneg %p234
      $region46: #{c3_forward.1} parent=11 // pred_check_branch
        %364 = sbr.rel (%p362) target = $region48
      $region47: #{c3_forward.1} parent=11 // pred_region
        _
      $region48: #{c3_forward.1} parent=11 // pred_fallthru
        _
      // Predicated region
      $region49: #{c3_forward.1} parent=11 // pred_check
        %p365 = pneg %p255
      $region50: #{c3_forward.1} parent=11 // pred_check_branch
        %367 = sbr.rel (%p365) target = $region52
      $region51: #{c3_forward.1} parent=11 // pred_region
        _
      $region52: #{c3_forward.1} parent=11 // pred_fallthru
        _
      // Predicated region
      $region53: #{c3_forward.1} parent=11 // pred_check
        %p368 = pneg %p276
      $region54: #{c3_forward.1} parent=11 // pred_check_branch
        %370 = sbr.rel (%p368) target = $region56
      $region55: #{c3_forward.1} parent=11 // pred_region
        _
      $region56: #{c3_forward.1} parent=11 // pred_fallthru
        _
      // Predicated region
      $region57: #{c3_forward.1} parent=11 // pred_check
        %p371 = pneg %p297
      $region58: #{c3_forward.1} parent=11 // pred_check_branch
        %373 = sbr.rel (%p371) target = $region60
      $region59: #{c3_forward.1} parent=11 // pred_region
        _
      $region60: #{c3_forward.1} parent=11 // pred_fallthru
        _
    $region12: #{c3_forward.1} parent=5 // pred_fallthru
      _
    %p374 = scmp.lt.s32.totalorder %s19, 2
    // Predicated region
    $region61: #{c3_forward.1} parent=5 // pred_check
      %p375 = pneg %p374
    $region62: #{c3_forward.1} parent=5 // pred_check_branch
      %377 = sbr.rel (%p375) target = $region64
    $region63: #{c3_forward.1} parent=5 // pred_region
      // Predicated region
      $region65: #{c3_forward.1} parent=63 // pred_check
        %p378 = pneg %p39
      $region66: #{c3_forward.1} parent=63 // pred_check_branch
        %380 = sbr.rel (%p378) target = $region68
      $region67: #{c3_forward.1} parent=63 // pred_region
        %p381 = scmp.lt.s32.totalorder %s19, 1
        %s382 = scalar_select %p381, %s19, 1
        %s383 = smul.addr %s382, 2
        %s384 = smul.addr %s383, 4
        %s385 = scalar_lea.vmem %s0, %s384
      $region68: #{c3_forward.1} parent=63 // pred_fallthru
        _
    $region64: #{c3_forward.1} parent=5 // pred_fallthru
      _
    %p386 = scmp.le.s32.totalorder 1, %s19
    %p387 = scmp.lt.s32.totalorder %s19, 3
    %p388 = pnand %p386, %p387
    %p389 = pneg %p388
    // Predicated region
    $region69: #{c3_forward.1} parent=5 // pred_check
      _
    $region70: #{c3_forward.1} parent=5 // pred_check_branch
      %391 = sbr.rel (%p388) target = $region72
    $region71: #{c3_forward.1} parent=5 // pred_region
      %s392 = ssub.s32 %s19, 1
      %p393 = scmp.lt.s32.totalorder %s24, 1
      %s394 = scalar_select %p393, %s24, 1
      %s395 = smul.addr %s394, 2
      %s396 = smul.addr %s395, 4
      %s397 = scalar_lea.vmem %s0, %s396
      %p398 = pneg %p45
      %p399 = pneg %p42
      %p400 = pneg %p66
      %p401 = pneg %p63
      %p402 = pneg %p87
      %p403 = pneg %p84
      %p404 = pneg %p108
      %p405 = pneg %p105
      %p406 = pneg %p129
      %p407 = pneg %p126
      %p408 = pneg %p150
      %p409 = pneg %p147
      %p410 = pneg %p171
      %p411 = pneg %p168
      %p412 = pneg %p192
      %p413 = pneg %p189
      %p414 = pneg %p213
      %p415 = pneg %p210
      %p416 = pneg %p234
      %p417 = pneg %p231
      %p418 = pneg %p255
      %p419 = pneg %p252
      %p420 = pneg %p276
      %p421 = pneg %p273
      %p422 = pneg %p297
      %p423 = pneg %p294
      %p424 = pneg %p323
      %p425 = pneg %p320
      %p426 = scmp.lt.s32.totalorder %s24, 1
      %s427 = scalar_select %p426, %s24, 1
      %s428 = smul.addr %s427, 2
      %s429 = smul.addr %s428, 8
      %s430 = scalar_lea.vmem %s13, %s429
      %p431 = scmp.lt.s32.totalorder %s24, 1
      %s432 = scalar_select %p431, %s24, 1
      %s433 = smul.addr %s432, 2
      %s434 = smul.addr %s433, 4
      %s435 = scalar_lea.vmem %s0, %s434
      %p436 = scmp.lt.s32.totalorder %s24, 1
      %s437 = scalar_select %p436, %s24, 1
      %s438 = smul.addr %s437, 2
      %s439 = smul.addr %s438, 8
      %s440 = scalar_lea.vmem %s13, %s439
      %v441 = vld [vmem:[%s435] sm:$0xff]
      %v442 = vld [vmem:[%s1] sm:$0xf]
      %v443 = vld [vmem:[%s2] sm:$0xf]
      %445 = vset.pattern.permute.xlu0 0
      %446 = vperm.xlu0 %445, %v443
      %v447 = vpop.permute.xlu0 %446
      %v450 = vcombine.high %v441, %v441
      %vm451 = vcmask 31744
      %v453 = vsel %vm451, %v442, 0
      %vm455 = vcmask 1043456
      %v456 = vsel %vm455, %v441, 0
      %v458 = vsel %vm455, %v450, 0
      %460 = vmatprep.subr.mxu0 0.0
      %461 = vmatpush1.msra.mxu0 0.0
      %462 = vmatprep.subr.mxu0 0.0
      %463 = vmatpush1.msra.mxu0 0.0
      %464 = vmatprep.subr.mxu0 0.0
      %465 = vmatpush1.msra.mxu0 0.0
      %466 = vmatprep.subr.mxu0 0.0
      %467 = vmatpush1.msra.mxu0 0.0
      %468 = vmatprep.subr.mxu0 0.0
      %469 = vmatpush1.msra.mxu0 0.0
      %470 = vmatprep.subr.mxu0 0.0
      %471 = vmatpush1.msra.mxu0 0.0
      %472 = vmatprep.subr.mxu0 0.0
      %473 = vmatpush1.msra.mxu0 0.0
      %474 = vmatprep.subr.mxu0 0.0
      %475 = vmatpush1.msra.mxu0 0.0
      %476 = vmatprep.subr.mxu0 0.0
      %477 = vmatpush1.msra.mxu0 0.0
      %478 = vmatprep.subr.mxu0 0.0
      %479 = vmatpush1.msra.mxu0 0.0
      %480 = vmatprep.subr.mxu0 0.0
      %481 = vmatpush1.msra.mxu0 0.0
      %482 = vmatprep.subr.mxu0 0.0
      %483 = vmatpush1.msra.mxu0 0.0
      %484 = vmatprep.subr.mxu0 0.0
      %485 = vmatpush1.msra.mxu0 0.0
      %486 = vmatprep.subr.mxu0 0.0
      %487 = vmatpush1.msra.mxu0 0.0
      %488 = vmatprep.subr.mxu0 0.0
      %489 = vmatpush1.msra.mxu0 0.0
      %490 = vmatprep.subr.mxu0 %v458
      %491 = vmatpush1.msra.mxu0 %v456
      %492 = vmatprep.subr.mxu0 0.0
      %493 = vmatpush2.msra.mxu0 0.0
      %494 = vmatprep.subr.mxu0 0.0
      %495 = vmatpush2.msra.mxu0 0.0
      %496 = vmatprep.subr.mxu0 0.0
      %497 = vmatpush2.msra.mxu0 0.0
      %498 = vmatprep.subr.mxu0 0.0
      %499 = vmatpush2.msra.mxu0 0.0
      %500 = vmatprep.subr.mxu0 0.0
      %501 = vmatpush2.msra.mxu0 0.0
      %502 = vmatprep.subr.mxu0 0.0
      %503 = vmatpush2.msra.mxu0 0.0
      %504 = vmatprep.subr.mxu0 0.0
      %505 = vmatpush2.msra.mxu0 0.0
      %506 = vmatprep.subr.mxu0 0.0
      %507 = vmatpush2.msra.mxu0 0.0
      %508 = vmatprep.subr.mxu0 0.0
      %509 = vmatpush2.msra.mxu0 0.0
      %510 = vmatprep.subr.mxu0 0.0
      %511 = vmatpush2.msra.mxu0 0.0
      %512 = vmatprep.subr.mxu0 0.0
      %513 = vmatpush2.msra.mxu0 0.0
      %514 = vmatprep.subr.mxu0 0.0
      %515 = vmatpush2.msra.mxu0 0.0
      %516 = vmatprep.subr.mxu0 0.0
      %517 = vmatpush2.msra.mxu0 0.0
      %518 = vmatprep.subr.mxu0 0.0
      %519 = vmatpush2.msra.mxu0 0.0
      %520 = vmatprep.subr.mxu0 0.0
      %521 = vmatpush2.msra.mxu0 0.0
      %522 = vmatprep.subr.mxu0 0.0
      %523 = vmatpush2.msra.mxu0 0.0
      %524 = vmatprep.mubr.f32.mxu0 0.0
      %525 = vmatmul.mubr.f32.gmra.mxu0 %v453
      %v526 = vpop.f32.mrf.mxu0
      %v527 = vadd.f32 %v447, %v526
      %v528 = vpop.f32.mrf.mxu0
      %v529 = vadd.f32 %v447, %v528
      %530 = vdwg.mxu0
      %v531 = vmax.f32 %v527, 0.0
      %v532 = vmax.f32 %v529, 0.0
      %v533 = vld [vmem:[%s3] sm:$0xf]
      %v534 = vld [vmem:[%s4] sm:$0xf]
      %536 = vset.pattern.permute.xlu0 0
      %537 = vperm.xlu0 %536, %v534
      %v538 = vpop.permute.xlu0 %537
      %v541 = vsel %vm451, %v533, 0
      %543 = vmatprep.subr.mxu0 0.0
      %544 = vmatpush1.msra.mxu0 0.0
      %545 = vmatprep.subr.mxu0 0.0
      %546 = vmatpush1.msra.mxu0 0.0
      %547 = vmatprep.subr.mxu0 0.0
      %548 = vmatpush1.msra.mxu0 0.0
      %549 = vmatprep.subr.mxu0 0.0
      %550 = vmatpush1.msra.mxu0 0.0
      %551 = vmatprep.subr.mxu0 0.0
      %552 = vmatpush1.msra.mxu0 0.0
      %553 = vmatprep.subr.mxu0 0.0
      %554 = vmatpush1.msra.mxu0 0.0
      %555 = vmatprep.subr.mxu0 0.0
      %556 = vmatpush1.msra.mxu0 0.0
      %557 = vmatprep.subr.mxu0 0.0
      %558 = vmatpush1.msra.mxu0 0.0
      %559 = vmatprep.subr.mxu0 0.0
      %560 = vmatpush1.msra.mxu0 0.0
      %561 = vmatprep.subr.mxu0 0.0
      %562 = vmatpush1.msra.mxu0 0.0
      %563 = vmatprep.subr.mxu0 0.0
      %564 = vmatpush1.msra.mxu0 0.0
      %565 = vmatprep.subr.mxu0 0.0
      %566 = vmatpush1.msra.mxu0 0.0
      %567 = vmatprep.subr.mxu0 0.0
      %568 = vmatpush1.msra.mxu0 0.0
      %569 = vmatprep.subr.mxu0 0.0
      %570 = vmatpush1.msra.mxu0 0.0
      %571 = vmatprep.subr.mxu0 0.0
      %572 = vmatpush1.msra.mxu0 0.0
      %573 = vmatprep.subr.mxu0 %v458
      %574 = vmatpush1.msra.mxu0 %v456
      %575 = vmatprep.subr.mxu0 0.0
      %576 = vmatpush2.msra.mxu0 0.0
      %577 = vmatprep.subr.mxu0 0.0
      %578 = vmatpush2.msra.mxu0 0.0
      %579 = vmatprep.subr.mxu0 0.0
      %580 = vmatpush2.msra.mxu0 0.0
      %581 = vmatprep.subr.mxu0 0.0
      %582 = vmatpush2.msra.mxu0 0.0
      %583 = vmatprep.subr.mxu0 0.0
      %584 = vmatpush2.msra.mxu0 0.0
      %585 = vmatprep.subr.mxu0 0.0
      %586 = vmatpush2.msra.mxu0 0.0
      %587 = vmatprep.subr.mxu0 0.0
      %588 = vmatpush2.msra.mxu0 0.0
      %589 = vmatprep.subr.mxu0 0.0
      %590 = vmatpush2.msra.mxu0 0.0
      %591 = vmatprep.subr.mxu0 0.0
      %592 = vmatpush2.msra.mxu0 0.0
      %593 = vmatprep.subr.mxu0 0.0
      %594 = vmatpush2.msra.mxu0 0.0
      %595 = vmatprep.subr.mxu0 0.0
      %596 = vmatpush2.msra.mxu0 0.0
      %597 = vmatprep.subr.mxu0 0.0
      %598 = vmatpush2.msra.mxu0 0.0
      %599 = vmatprep.subr.mxu0 0.0
      %600 = vmatpush2.msra.mxu0 0.0
      %601 = vmatprep.subr.mxu0 0.0
      %602 = vmatpush2.msra.mxu0 0.0
      %603 = vmatprep.subr.mxu0 0.0
      %604 = vmatpush2.msra.mxu0 0.0
      %605 = vmatprep.subr.mxu0 0.0
      %606 = vmatpush2.msra.mxu0 0.0
      %607 = vmatprep.mubr.f32.mxu0 0.0
      %608 = vmatmul.mubr.f32.gmra.mxu0 %v541
      %v609 = vpop.f32.mrf.mxu0
      %v610 = vadd.f32 %v538, %v609
      %v611 = vpop.f32.mrf.mxu0
      %v612 = vadd.f32 %v538, %v611
      %613 = vdwg.mxu0
      %v614 = vmax.f32 %v610, 0.0
      %v615 = vmax.f32 %v612, 0.0
      %v616 = vld [vmem:[%s5] sm:$0xf]
      %v617 = vld [vmem:[%s6] sm:$0xf]
      %619 = vset.pattern.permute.xlu0 0
      %620 = vperm.xlu0 %619, %v617
      %v621 = vpop.permute.xlu0 %620
      %v624 = vsel %vm451, %v616, 0
      %v627 = vsel %vm455, %v531, 0
      %v630 = vsel %vm455, %v532, 0
      %632 = vmatprep.subr.mxu0 0.0
      %633 = vmatpush1.msra.mxu0 0.0
      %634 = vmatprep.subr.mxu0 0.0
      %635 = vmatpush1.msra.mxu0 0.0
      %636 = vmatprep.subr.mxu0 0.0
      %637 = vmatpush1.msra.mxu0 0.0
      %638 = vmatprep.subr.mxu0 0.0
      %639 = vmatpush1.msra.mxu0 0.0
      %640 = vmatprep.subr.mxu0 0.0
      %641 = vmatpush1.msra.mxu0 0.0
      %642 = vmatprep.subr.mxu0 0.0
      %643 = vmatpush1.msra.mxu0 0.0
      %644 = vmatprep.subr.mxu0 0.0
      %645 = vmatpush1.msra.mxu0 0.0
      %646 = vmatprep.subr.mxu0 0.0
      %647 = vmatpush1.msra.mxu0 0.0
      %648 = vmatprep.subr.mxu0 0.0
      %649 = vmatpush1.msra.mxu0 0.0
      %650 = vmatprep.subr.mxu0 0.0
      %651 = vmatpush1.msra.mxu0 0.0
      %652 = vmatprep.subr.mxu0 0.0
      %653 = vmatpush1.msra.mxu0 0.0
      %654 = vmatprep.subr.mxu0 0.0
      %655 = vmatpush1.msra.mxu0 0.0
      %656 = vmatprep.subr.mxu0 0.0
      %657 = vmatpush1.msra.mxu0 0.0
      %658 = vmatprep.subr.mxu0 0.0
      %659 = vmatpush1.msra.mxu0 0.0
      %660 = vmatprep.subr.mxu0 0.0
      %661 = vmatpush1.msra.mxu0 0.0
      %662 = vmatprep.subr.mxu0 %v630
      %663 = vmatpush1.msra.mxu0 %v627
      %664 = vmatprep.subr.mxu0 0.0
      %665 = vmatpush2.msra.mxu0 0.0
      %666 = vmatprep.subr.mxu0 0.0
      %667 = vmatpush2.msra.mxu0 0.0
      %668 = vmatprep.subr.mxu0 0.0
      %669 = vmatpush2.msra.mxu0 0.0
      %670 = vmatprep.subr.mxu0 0.0
      %671 = vmatpush2.msra.mxu0 0.0
      %672 = vmatprep.subr.mxu0 0.0
      %673 = vmatpush2.msra.mxu0 0.0
      %674 = vmatprep.subr.mxu0 0.0
      %675 = vmatpush2.msra.mxu0 0.0
      %676 = vmatprep.subr.mxu0 0.0
      %677 = vmatpush2.msra.mxu0 0.0
      %678 = vmatprep.subr.mxu0 0.0
      %679 = vmatpush2.msra.mxu0 0.0
      %680 = vmatprep.subr.mxu0 0.0
      %681 = vmatpush2.msra.mxu0 0.0
      %682 = vmatprep.subr.mxu0 0.0
      %683 = vmatpush2.msra.mxu0 0.0
      %684 = vmatprep.subr.mxu0 0.0
      %685 = vmatpush2.msra.mxu0 0.0
      %686 = vmatprep.subr.mxu0 0.0
      %687 = vmatpush2.msra.mxu0 0.0
      %688 = vmatprep.subr.mxu0 0.0
      %689 = vmatpush2.msra.mxu0 0.0
      %690 = vmatprep.subr.mxu0 0.0
      %691 = vmatpush2.msra.mxu0 0.0
      %692 = vmatprep.subr.mxu0 0.0
      %693 = vmatpush2.msra.mxu0 0.0
      %694 = vmatprep.subr.mxu0 0.0
      %695 = vmatpush2.msra.mxu0 0.0
      %696 = vmatprep.mubr.f32.mxu0 0.0
      %697 = vmatmul.mubr.f32.gmra.mxu0 %v624
      %v698 = vpop.f32.mrf.mxu0
      %v699 = vadd.f32 %v621, %v698
      %v700 = vpop.f32.mrf.mxu0
      %v701 = vadd.f32 %v621, %v700
      %702 = vdwg.mxu0
      %v703 = vmax.f32 %v699, 0.0
      %v704 = vmax.f32 %v701, 0.0
      %v705 = vld [vmem:[%s12] ss:$8 sm:$0x3]
      %v706 = vld [vmem:[%s7] sm:$0xf]
      %v708 = vlaneseq
      %v709 = vshrl.u32 %v708, 7
      %v710 = vsub.s32 0, %v709
      %v711 = vrot.slane %v705, %v710
      %v712 = vlaneseq
      %v713 = vshrl.u32 %v712, 7
      %v714 = vsub.s32 1, %v713
      %v715 = vrot.slane %v705, %v714
      %716 = vrot.lane.b32.xlu0 %v711, 111
      %v717 = vpop.permute.xlu0 %716
      %718 = vrot.lane.b32.xlu0 %v715, 111
      %v719 = vpop.permute.xlu0 %718
      %vm720 = vcmask 908288
      %v721 = vsel %vm720, %v717, %v719
      %v725 = vmul.f32 %v717, 0.0
      %v726 = vmul.f32 %v703, %v721
      %v727 = vmul.f32 %v704, %v719
      %s728 = scalar_lea.vmem %s12, 1
      %v729 = vld [vmem:[%s728] ss:$8 sm:$0x3]
      %s730 = scalar_lea.vmem %s7, 4
      %v731 = vld [vmem:[%s730] sm:$0xf]
      %v733 = vlaneseq
      %v734 = vshrl.u32 %v733, 7
      %v735 = vsub.s32 0, %v734
      %v736 = vrot.slane %v729, %v735
      %v737 = vlaneseq
      %v738 = vshrl.u32 %v737, 7
      %v739 = vsub.s32 1, %v738
      %v740 = vrot.slane %v729, %v739
      %741 = vrot.lane.b32.xlu0 %v736, 112
      %v742 = vpop.permute.xlu0 %741
      %743 = vrot.lane.b32.xlu0 %v740, 112
      %v744 = vpop.permute.xlu0 %743
      %vm745 = vcmask 916480
      %v746 = vsel %vm745, %v742, %v744
      %v750 = vmul.f32 %v742, 0.0
      %v751 = vmul.f32 %v703, %v746
      %v752 = vmul.f32 %v704, %v744
      %756 = vrot.lane.b32.xlu0 %v750, 16
      %v757 = vpop.permute.xlu0 %756
      %758 = vrot.lane.b32.xlu0 %v751, 16
      %v759 = vpop.permute.xlu0 %758
      %760 = vrot.lane.b32.xlu0 %v752, 16
      %v761 = vpop.permute.xlu0 %760
      %vm762 = vcmask 130048
      %v763 = vsel %vm762, %v757, %v759
      %v764 = vsel %vm762, %v759, %v761
      %v766 = vsel %vm451, %v731, 0
      %v768 = vsel %vm455, %v763, 0
      %v770 = vsel %vm455, %v764, 0
      %772 = vmatprep.subr.mxu0 0.0
      %773 = vmatpush1.msra.mxu0 0.0
      %774 = vmatprep.subr.mxu0 0.0
      %775 = vmatpush1.msra.mxu0 0.0
      %776 = vmatprep.subr.mxu0 0.0
      %777 = vmatpush1.msra.mxu0 0.0
      %778 = vmatprep.subr.mxu0 0.0
      %779 = vmatpush1.msra.mxu0 0.0
      %780 = vmatprep.subr.mxu0 0.0
      %781 = vmatpush1.msra.mxu0 0.0
      %782 = vmatprep.subr.mxu0 0.0
      %783 = vmatpush1.msra.mxu0 0.0
      %784 = vmatprep.subr.mxu0 0.0
      %785 = vmatpush1.msra.mxu0 0.0
      %786 = vmatprep.subr.mxu0 0.0
      %787 = vmatpush1.msra.mxu0 0.0
      %788 = vmatprep.subr.mxu0 0.0
      %789 = vmatpush1.msra.mxu0 0.0
      %790 = vmatprep.subr.mxu0 0.0
      %791 = vmatpush1.msra.mxu0 0.0
      %792 = vmatprep.subr.mxu0 0.0
      %793 = vmatpush1.msra.mxu0 0.0
      %794 = vmatprep.subr.mxu0 0.0
      %795 = vmatpush1.msra.mxu0 0.0
      %796 = vmatprep.subr.mxu0 0.0
      %797 = vmatpush1.msra.mxu0 0.0
      %798 = vmatprep.subr.mxu0 0.0
      %799 = vmatpush1.msra.mxu0 0.0
      %800 = vmatprep.subr.mxu0 0.0
      %801 = vmatpush1.msra.mxu0 0.0
      %802 = vmatprep.subr.mxu0 %v770
      %803 = vmatpush1.msra.mxu0 %v768
      %804 = vmatprep.subr.mxu0 0.0
      %805 = vmatpush2.msra.mxu0 0.0
      %806 = vmatprep.subr.mxu0 0.0
      %807 = vmatpush2.msra.mxu0 0.0
      %808 = vmatprep.subr.mxu0 0.0
      %809 = vmatpush2.msra.mxu0 0.0
      %810 = vmatprep.subr.mxu0 0.0
      %811 = vmatpush2.msra.mxu0 0.0
      %812 = vmatprep.subr.mxu0 0.0
      %813 = vmatpush2.msra.mxu0 0.0
      %814 = vmatprep.subr.mxu0 0.0
      %815 = vmatpush2.msra.mxu0 0.0
      %816 = vmatprep.subr.mxu0 0.0
      %817 = vmatpush2.msra.mxu0 0.0
      %818 = vmatprep.subr.mxu0 0.0
      %819 = vmatpush2.msra.mxu0 0.0
      %820 = vmatprep.subr.mxu0 0.0
      %821 = vmatpush2.msra.mxu0 0.0
      %822 = vmatprep.subr.mxu0 0.0
      %823 = vmatpush2.msra.mxu0 0.0
      %824 = vmatprep.subr.mxu0 0.0
      %825 = vmatpush2.msra.mxu0 0.0
      %826 = vmatprep.subr.mxu0 0.0
      %827 = vmatpush2.msra.mxu0 0.0
      %828 = vmatprep.subr.mxu0 0.0
      %829 = vmatpush2.msra.mxu0 0.0
      %830 = vmatprep.subr.mxu0 0.0
      %831 = vmatpush2.msra.mxu0 0.0
      %832 = vmatprep.subr.mxu0 0.0
      %833 = vmatpush2.msra.mxu0 0.0
      %834 = vmatprep.subr.mxu0 0.0
      %835 = vmatpush2.msra.mxu0 0.0
      %836 = vmatprep.mubr.f32.mxu0 0.0
      %837 = vmatmul.mubr.f32.gmra.mxu0 %v766
      %v838 = vpop.f32.mrf.mxu0
      %v839 = vadd.f32 0.0, %v838
      %v840 = vpop.f32.mrf.mxu0
      %v841 = vadd.f32 0.0, %v840
      %842 = vdwg.mxu0
      %846 = vrot.lane.b32.xlu0 %v725, 17
      %v847 = vpop.permute.xlu0 %846
      %848 = vrot.lane.b32.xlu0 %v726, 17
      %v849 = vpop.permute.xlu0 %848
      %850 = vrot.lane.b32.xlu0 %v727, 17
      %v851 = vpop.permute.xlu0 %850
      %vm852 = vcmask 138240
      %v853 = vsel %vm852, %v847, %v849
      %v854 = vsel %vm852, %v849, %v851
      %v856 = vsel %vm451, %v706, 0
      %v858 = vsel %vm455, %v853, 0
      %v860 = vsel %vm455, %v854, 0
      %862 = vmatprep.subr.mxu0 0.0
      %863 = vmatpush1.msra.mxu0 0.0
      %864 = vmatprep.subr.mxu0 0.0
      %865 = vmatpush1.msra.mxu0 0.0
      %866 = vmatprep.subr.mxu0 0.0
      %867 = vmatpush1.msra.mxu0 0.0
      %868 = vmatprep.subr.mxu0 0.0
      %869 = vmatpush1.msra.mxu0 0.0
      %870 = vmatprep.subr.mxu0 0.0
      %871 = vmatpush1.msra.mxu0 0.0
      %872 = vmatprep.subr.mxu0 0.0
      %873 = vmatpush1.msra.mxu0 0.0
      %874 = vmatprep.subr.mxu0 0.0
      %875 = vmatpush1.msra.mxu0 0.0
      %876 = vmatprep.subr.mxu0 0.0
      %877 = vmatpush1.msra.mxu0 0.0
      %878 = vmatprep.subr.mxu0 0.0
      %879 = vmatpush1.msra.mxu0 0.0
      %880 = vmatprep.subr.mxu0 0.0
      %881 = vmatpush1.msra.mxu0 0.0
      %882 = vmatprep.subr.mxu0 0.0
      %883 = vmatpush1.msra.mxu0 0.0
      %884 = vmatprep.subr.mxu0 0.0
      %885 = vmatpush1.msra.mxu0 0.0
      %886 = vmatprep.subr.mxu0 0.0
      %887 = vmatpush1.msra.mxu0 0.0
      %888 = vmatprep.subr.mxu0 0.0
      %889 = vmatpush1.msra.mxu0 0.0
      %890 = vmatprep.subr.mxu0 0.0
      %891 = vmatpush1.msra.mxu0 0.0
      %892 = vmatprep.subr.mxu0 %v860
      %893 = vmatpush1.msra.mxu0 %v858
      %894 = vmatprep.subr.mxu0 0.0
      %895 = vmatpush2.msra.mxu0 0.0
      %896 = vmatprep.subr.mxu0 0.0
      %897 = vmatpush2.msra.mxu0 0.0
      %898 = vmatprep.subr.mxu0 0.0
      %899 = vmatpush2.msra.mxu0 0.0
      %900 = vmatprep.subr.mxu0 0.0
      %901 = vmatpush2.msra.mxu0 0.0
      %902 = vmatprep.subr.mxu0 0.0
      %903 = vmatpush2.msra.mxu0 0.0
      %904 = vmatprep.subr.mxu0 0.0
      %905 = vmatpush2.msra.mxu0 0.0
      %906 = vmatprep.subr.mxu0 0.0
      %907 = vmatpush2.msra.mxu0 0.0
      %908 = vmatprep.subr.mxu0 0.0
      %909 = vmatpush2.msra.mxu0 0.0
      %910 = vmatprep.subr.mxu0 0.0
      %911 = vmatpush2.msra.mxu0 0.0
      %912 = vmatprep.subr.mxu0 0.0
      %913 = vmatpush2.msra.mxu0 0.0
      %914 = vmatprep.subr.mxu0 0.0
      %915 = vmatpush2.msra.mxu0 0.0
      %916 = vmatprep.subr.mxu0 0.0
      %917 = vmatpush2.msra.mxu0 0.0
      %918 = vmatprep.subr.mxu0 0.0
      %919 = vmatpush2.msra.mxu0 0.0
      %920 = vmatprep.subr.mxu0 0.0
      %921 = vmatpush2.msra.mxu0 0.0
      %922 = vmatprep.subr.mxu0 0.0
      %923 = vmatpush2.msra.mxu0 0.0
      %924 = vmatprep.subr.mxu0 0.0
      %925 = vmatpush2.msra.mxu0 0.0
      %926 = vmatprep.mubr.f32.mxu0 0.0
      %927 = vmatmul.mubr.f32.gmra.mxu0 %v856
      %v928 = vpop.f32.mrf.mxu0
      %v929 = vadd.f32 %v839, %v928
      %v930 = vpop.f32.mrf.mxu0
      %v931 = vadd.f32 %v841, %v930
      %932 = vdwg.mxu0
      %s933 = scalar_lea.vmem %s12, 2
      %v934 = vld [vmem:[%s933] ss:$8 sm:$0x3]
      %s935 = scalar_lea.vmem %s7, 8
      %v936 = vld [vmem:[%s935] sm:$0xf]
      %v938 = vlaneseq
      %v939 = vshrl.u32 %v938, 7
      %v940 = vsub.s32 0, %v939
      %v941 = vrot.slane %v934, %v940
      %v942 = vlaneseq
      %v943 = vshrl.u32 %v942, 7
      %v944 = vsub.s32 1, %v943
      %v945 = vrot.slane %v934, %v944
      %946 = vrot.lane.b32.xlu0 %v941, 113
      %v947 = vpop.permute.xlu0 %946
      %948 = vrot.lane.b32.xlu0 %v945, 113
      %v949 = vpop.permute.xlu0 %948
      %vm950 = vcmask 924672
      %v951 = vsel %vm950, %v947, %v949
      %v955 = vmul.f32 %v947, 0.0
      %v956 = vmul.f32 %v703, %v951
      %v957 = vmul.f32 %v704, %v949
      %961 = vrot.lane.b32.xlu0 %v955, 15
      %v962 = vpop.permute.xlu0 %961
      %963 = vrot.lane.b32.xlu0 %v956, 15
      %v964 = vpop.permute.xlu0 %963
      %965 = vrot.lane.b32.xlu0 %v957, 15
      %v966 = vpop.permute.xlu0 %965
      %vm967 = vcmask 121856
      %v968 = vsel %vm967, %v962, %v964
      %v969 = vsel %vm967, %v964, %v966
      %v971 = vsel %vm451, %v936, 0
      %v973 = vsel %vm455, %v968, 0
      %v975 = vsel %vm455, %v969, 0
      %977 = vmatprep.subr.mxu0 0.0
      %978 = vmatpush1.msra.mxu0 0.0
      %979 = vmatprep.subr.mxu0 0.0
      %980 = vmatpush1.msra.mxu0 0.0
      %981 = vmatprep.subr.mxu0 0.0
      %982 = vmatpush1.msra.mxu0 0.0
      %983 = vmatprep.subr.mxu0 0.0
      %984 = vmatpush1.msra.mxu0 0.0
      %985 = vmatprep.subr.mxu0 0.0
      %986 = vmatpush1.msra.mxu0 0.0
      %987 = vmatprep.subr.mxu0 0.0
      %988 = vmatpush1.msra.mxu0 0.0
      %989 = vmatprep.subr.mxu0 0.0
      %990 = vmatpush1.msra.mxu0 0.0
      %991 = vmatprep.subr.mxu0 0.0
      %992 = vmatpush1.msra.mxu0 0.0
      %993 = vmatprep.subr.mxu0 0.0
      %994 = vmatpush1.msra.mxu0 0.0
      %995 = vmatprep.subr.mxu0 0.0
      %996 = vmatpush1.msra.mxu0 0.0
      %997 = vmatprep.subr.mxu0 0.0
      %998 = vmatpush1.msra.mxu0 0.0
      %999 = vmatprep.subr.mxu0 0.0
      %1000 = vmatpush1.msra.mxu0 0.0
      %1001 = vmatprep.subr.mxu0 0.0
      %1002 = vmatpush1.msra.mxu0 0.0
      %1003 = vmatprep.subr.mxu0 0.0
      %1004 = vmatpush1.msra.mxu0 0.0
      %1005 = vmatprep.subr.mxu0 0.0
      %1006 = vmatpush1.msra.mxu0 0.0
      %1007 = vmatprep.subr.mxu0 %v975
      %1008 = vmatpush1.msra.mxu0 %v973
      %1009 = vmatprep.subr.mxu0 0.0
      %1010 = vmatpush2.msra.mxu0 0.0
      %1011 = vmatprep.subr.mxu0 0.0
      %1012 = vmatpush2.msra.mxu0 0.0
      %1013 = vmatprep.subr.mxu0 0.0
      %1014 = vmatpush2.msra.mxu0 0.0
      %1015 = vmatprep.subr.mxu0 0.0
      %1016 = vmatpush2.msra.mxu0 0.0
      %1017 = vmatprep.subr.mxu0 0.0
      %1018 = vmatpush2.msra.mxu0 0.0
      %1019 = vmatprep.subr.mxu0 0.0
      %1020 = vmatpush2.msra.mxu0 0.0
      %1021 = vmatprep.subr.mxu0 0.0
      %1022 = vmatpush2.msra.mxu0 0.0
      %1023 = vmatprep.subr.mxu0 0.0
      %1024 = vmatpush2.msra.mxu0 0.0
      %1025 = vmatprep.subr.mxu0 0.0
      %1026 = vmatpush2.msra.mxu0 0.0
      %1027 = vmatprep.subr.mxu0 0.0
      %1028 = vmatpush2.msra.mxu0 0.0
      %1029 = vmatprep.subr.mxu0 0.0
      %1030 = vmatpush2.msra.mxu0 0.0
      %1031 = vmatprep.subr.mxu0 0.0
      %1032 = vmatpush2.msra.mxu0 0.0
      %1033 = vmatprep.subr.mxu0 0.0
      %1034 = vmatpush2.msra.mxu0 0.0
      %1035 = vmatprep.subr.mxu0 0.0
      %1036 = vmatpush2.msra.mxu0 0.0
      %1037 = vmatprep.subr.mxu0 0.0
      %1038 = vmatpush2.msra.mxu0 0.0
      %1039 = vmatprep.subr.mxu0 0.0
      %1040 = vmatpush2.msra.mxu0 0.0
      %1041 = vmatprep.mubr.f32.mxu0 0.0
      %1042 = vmatmul.mubr.f32.gmra.mxu0 %v971
      %v1043 = vpop.f32.mrf.mxu0
      %v1044 = vadd.f32 0.0, %v1043
      %v1045 = vpop.f32.mrf.mxu0
      %v1046 = vadd.f32 0.0, %v1045
      %1047 = vdwg.mxu0
      %v1048 = vadd.f32 %v929, %v1044
      %v1049 = vadd.f32 %v931, %v1046
      %s1050 = scalar_lea.vmem %s12, 3
      %v1051 = vld [vmem:[%s1050] ss:$8 sm:$0x3]
      %s1052 = scalar_lea.vmem %s7, 12
      %v1053 = vld [vmem:[%s1052] sm:$0xf]
      %v1055 = vlaneseq
      %v1056 = vshrl.u32 %v1055, 7
      %v1057 = vsub.s32 0, %v1056
      %v1058 = vrot.slane %v1051, %v1057
      %v1059 = vlaneseq
      %v1060 = vshrl.u32 %v1059, 7
      %v1061 = vsub.s32 1, %v1060
      %v1062 = vrot.slane %v1051, %v1061
      %1063 = vrot.lane.b32.xlu0 %v1058, 127
      %v1064 = vpop.permute.xlu0 %1063
      %1065 = vrot.lane.b32.xlu0 %v1062, 127
      %v1066 = vpop.permute.xlu0 %1065
      %vm1067 = vcmask 1039360
      %v1068 = vsel %vm1067, %v1064, %v1066
      %v1072 = vmul.f32 %v1064, 0.0
      %v1073 = vmul.f32 %v703, %v1068
      %v1074 = vmul.f32 %v704, %v1066
      %1078 = vrot.lane.b32.xlu0 %v1072, 1
      %v1079 = vpop.permute.xlu0 %1078
      %1080 = vrot.lane.b32.xlu0 %v1073, 1
      %v1081 = vpop.permute.xlu0 %1080
      %1082 = vrot.lane.b32.xlu0 %v1074, 1
      %v1083 = vpop.permute.xlu0 %1082
      %vm1084 = vcmask 7168
      %v1085 = vsel %vm1084, %v1079, %v1081
      %v1086 = vsel %vm1084, %v1081, %v1083
      %v1088 = vsel %vm451, %v1053, 0
      %v1090 = vsel %vm455, %v1085, 0
      %v1092 = vsel %vm455, %v1086, 0
      %1094 = vmatprep.subr.mxu0 0.0
      %1095 = vmatpush1.msra.mxu0 0.0
      %1096 = vmatprep.subr.mxu0 0.0
      %1097 = vmatpush1.msra.mxu0 0.0
      %1098 = vmatprep.subr.mxu0 0.0
      %1099 = vmatpush1.msra.mxu0 0.0
      %1100 = vmatprep.subr.mxu0 0.0
      %1101 = vmatpush1.msra.mxu0 0.0
      %1102 = vmatprep.subr.mxu0 0.0
      %1103 = vmatpush1.msra.mxu0 0.0
      %1104 = vmatprep.subr.mxu0 0.0
      %1105 = vmatpush1.msra.mxu0 0.0
      %1106 = vmatprep.subr.mxu0 0.0
      %1107 = vmatpush1.msra.mxu0 0.0
      %1108 = vmatprep.subr.mxu0 0.0
      %1109 = vmatpush1.msra.mxu0 0.0
      %1110 = vmatprep.subr.mxu0 0.0
      %1111 = vmatpush1.msra.mxu0 0.0
      %1112 = vmatprep.subr.mxu0 0.0
      %1113 = vmatpush1.msra.mxu0 0.0
      %1114 = vmatprep.subr.mxu0 0.0
      %1115 = vmatpush1.msra.mxu0 0.0
      %1116 = vmatprep.subr.mxu0 0.0
      %1117 = vmatpush1.msra.mxu0 0.0
      %1118 = vmatprep.subr.mxu0 0.0
      %1119 = vmatpush1.msra.mxu0 0.0
      %1120 = vmatprep.subr.mxu0 0.0
      %1121 = vmatpush1.msra.mxu0 0.0
      %1122 = vmatprep.subr.mxu0 0.0
      %1123 = vmatpush1.msra.mxu0 0.0
      %1124 = vmatprep.subr.mxu0 %v1092
      %1125 = vmatpush1.msra.mxu0 %v1090
      %1126 = vmatprep.subr.mxu0 0.0
      %1127 = vmatpush2.msra.mxu0 0.0
      %1128 = vmatprep.subr.mxu0 0.0
      %1129 = vmatpush2.msra.mxu0 0.0
      %1130 = vmatprep.subr.mxu0 0.0
      %1131 = vmatpush2.msra.mxu0 0.0
      %1132 = vmatprep.subr.mxu0 0.0
      %1133 = vmatpush2.msra.mxu0 0.0
      %1134 = vmatprep.subr.mxu0 0.0
      %1135 = vmatpush2.msra.mxu0 0.0
      %1136 = vmatprep.subr.mxu0 0.0
      %1137 = vmatpush2.msra.mxu0 0.0
      %1138 = vmatprep.subr.mxu0 0.0
      %1139 = vmatpush2.msra.mxu0 0.0
      %1140 = vmatprep.subr.mxu0 0.0
      %1141 = vmatpush2.msra.mxu0 0.0
      %1142 = vmatprep.subr.mxu0 0.0
      %1143 = vmatpush2.msra.mxu0 0.0
      %1144 = vmatprep.subr.mxu0 0.0
      %1145 = vmatpush2.msra.mxu0 0.0
      %1146 = vmatprep.subr.mxu0 0.0
      %1147 = vmatpush2.msra.mxu0 0.0
      %1148 = vmatprep.subr.mxu0 0.0
      %1149 = vmatpush2.msra.mxu0 0.0
      %1150 = vmatprep.subr.mxu0 0.0
      %1151 = vmatpush2.msra.mxu0 0.0
      %1152 = vmatprep.subr.mxu0 0.0
      %1153 = vmatpush2.msra.mxu0 0.0
      %1154 = vmatprep.subr.mxu0 0.0
      %1155 = vmatpush2.msra.mxu0 0.0
      %1156 = vmatprep.subr.mxu0 0.0
      %1157 = vmatpush2.msra.mxu0 0.0
      %1158 = vmatprep.mubr.f32.mxu0 0.0
      %1159 = vmatmul.mubr.f32.gmra.mxu0 %v1088
      %v1160 = vpop.f32.mrf.mxu0
      %v1161 = vadd.f32 0.0, %v1160
      %v1162 = vpop.f32.mrf.mxu0
      %v1163 = vadd.f32 0.0, %v1162
      %1164 = vdwg.mxu0
      %v1165 = vadd.f32 %v1048, %v1161
      %v1166 = vadd.f32 %v1049, %v1163
      %s1167 = scalar_lea.vmem %s12, 4
      %v1168 = vld [vmem:[%s1167] ss:$8 sm:$0x3]
      %s1169 = scalar_lea.vmem %s7, 16
      %v1170 = vld [vmem:[%s1169] sm:$0xf]
      %v1172 = vlaneseq
      %v1173 = vshrl.u32 %v1172, 7
      %v1174 = vsub.s32 0, %v1173
      %v1175 = vrot.slane %v1168, %v1174
      %v1176 = vlaneseq
      %v1177 = vshrl.u32 %v1176, 7
      %v1178 = vsub.s32 1, %v1177
      %v1179 = vrot.slane %v1168, %v1178
      %v1182 = vmul.f32 %v703, %v1175
      %v1183 = vmul.f32 %v704, %v1179
      %v1185 = vsel %vm451, %v1170, 0
      %v1188 = vsel %vm455, %v1182, 0
      %v1191 = vsel %vm455, %v1183, 0
      %1193 = vmatprep.subr.mxu0 0.0
      %1194 = vmatpush1.msra.mxu0 0.0
      %1195 = vmatprep.subr.mxu0 0.0
      %1196 = vmatpush1.msra.mxu0 0.0
      %1197 = vmatprep.subr.mxu0 0.0
      %1198 = vmatpush1.msra.mxu0 0.0
      %1199 = vmatprep.subr.mxu0 0.0
      %1200 = vmatpush1.msra.mxu0 0.0
      %1201 = vmatprep.subr.mxu0 0.0
      %1202 = vmatpush1.msra.mxu0 0.0
      %1203 = vmatprep.subr.mxu0 0.0
      %1204 = vmatpush1.msra.mxu0 0.0
      %1205 = vmatprep.subr.mxu0 0.0
      %1206 = vmatpush1.msra.mxu0 0.0
      %1207 = vmatprep.subr.mxu0 0.0
      %1208 = vmatpush1.msra.mxu0 0.0
      %1209 = vmatprep.subr.mxu0 0.0
      %1210 = vmatpush1.msra.mxu0 0.0
      %1211 = vmatprep.subr.mxu0 0.0
      %1212 = vmatpush1.msra.mxu0 0.0
      %1213 = vmatprep.subr.mxu0 0.0
      %1214 = vmatpush1.msra.mxu0 0.0
      %1215 = vmatprep.subr.mxu0 0.0
      %1216 = vmatpush1.msra.mxu0 0.0
      %1217 = vmatprep.subr.mxu0 0.0
      %1218 = vmatpush1.msra.mxu0 0.0
      %1219 = vmatprep.subr.mxu0 0.0
      %1220 = vmatpush1.msra.mxu0 0.0
      %1221 = vmatprep.subr.mxu0 0.0
      %1222 = vmatpush1.msra.mxu0 0.0
      %1223 = vmatprep.subr.mxu0 %v1191
      %1224 = vmatpush1.msra.mxu0 %v1188
      %1225 = vmatprep.subr.mxu0 0.0
      %1226 = vmatpush2.msra.mxu0 0.0
      %1227 = vmatprep.subr.mxu0 0.0
      %1228 = vmatpush2.msra.mxu0 0.0
      %1229 = vmatprep.subr.mxu0 0.0
      %1230 = vmatpush2.msra.mxu0 0.0
      %1231 = vmatprep.subr.mxu0 0.0
      %1232 = vmatpush2.msra.mxu0 0.0
      %1233 = vmatprep.subr.mxu0 0.0
      %1234 = vmatpush2.msra.mxu0 0.0
      %1235 = vmatprep.subr.mxu0 0.0
      %1236 = vmatpush2.msra.mxu0 0.0
      %1237 = vmatprep.subr.mxu0 0.0
      %1238 = vmatpush2.msra.mxu0 0.0
      %1239 = vmatprep.subr.mxu0 0.0
      %1240 = vmatpush2.msra.mxu0 0.0
      %1241 = vmatprep.subr.mxu0 0.0
      %1242 = vmatpush2.msra.mxu0 0.0
      %1243 = vmatprep.subr.mxu0 0.0
      %1244 = vmatpush2.msra.mxu0 0.0
      %1245 = vmatprep.subr.mxu0 0.0
      %1246 = vmatpush2.msra.mxu0 0.0
      %1247 = vmatprep.subr.mxu0 0.0
      %1248 = vmatpush2.msra.mxu0 0.0
      %1249 = vmatprep.subr.mxu0 0.0
      %1250 = vmatpush2.msra.mxu0 0.0
      %1251 = vmatprep.subr.mxu0 0.0
      %1252 = vmatpush2.msra.mxu0 0.0
      %1253 = vmatprep.subr.mxu0 0.0
      %1254 = vmatpush2.msra.mxu0 0.0
      %1255 = vmatprep.subr.mxu0 0.0
      %1256 = vmatpush2.msra.mxu0 0.0
      %1257 = vmatprep.mubr.f32.mxu0 0.0
      %1258 = vmatmul.mubr.f32.gmra.mxu0 %v1185
      %v1259 = vpop.f32.mrf.mxu0
      %v1260 = vadd.f32 0.0, %v1259
      %v1261 = vpop.f32.mrf.mxu0
      %v1262 = vadd.f32 0.0, %v1261
      %1263 = vdwg.mxu0
      %v1264 = vadd.f32 %v1165, %v1260
      %v1265 = vadd.f32 %v1166, %v1262
      %s1266 = scalar_lea.vmem %s12, 5
      %v1267 = vld [vmem:[%s1266] ss:$8 sm:$0x3]
      %s1268 = scalar_lea.vmem %s7, 20
      %v1269 = vld [vmem:[%s1268] sm:$0xf]
      %v1271 = vlaneseq
      %v1272 = vshrl.u32 %v1271, 7
      %v1273 = vsub.s32 0, %v1272
      %v1274 = vrot.slane %v1267, %v1273
      %v1275 = vlaneseq
      %v1276 = vshrl.u32 %v1275, 7
      %v1277 = vsub.s32 1, %v1276
      %v1278 = vrot.slane %v1267, %v1277
      %1279 = vrot.lane.b32.xlu0 %v1274, 1
      %v1280 = vpop.permute.xlu0 %1279
      %1281 = vrot.lane.b32.xlu0 %v1278, 1
      %v1282 = vpop.permute.xlu0 %1281
      %v1283 = vsel %vm1084, %v1280, %v1282
      %v1287 = vmul.f32 %v703, %v1280
      %v1288 = vmul.f32 %v704, %v1283
      %v1289 = vmul.f32 %v1282, 0.0
      %1293 = vrot.lane.b32.xlu0 %v1287, 127
      %v1294 = vpop.permute.xlu0 %1293
      %1295 = vrot.lane.b32.xlu0 %v1288, 127
      %v1296 = vpop.permute.xlu0 %1295
      %1297 = vrot.lane.b32.xlu0 %v1289, 127
      %v1298 = vpop.permute.xlu0 %1297
      %v1299 = vsel %vm1067, %v1294, %v1296
      %v1300 = vsel %vm1067, %v1296, %v1298
      %v1302 = vsel %vm451, %v1269, 0
      %v1304 = vsel %vm455, %v1299, 0
      %v1306 = vsel %vm455, %v1300, 0
      %1308 = vmatprep.subr.mxu0 0.0
      %1309 = vmatpush1.msra.mxu0 0.0
      %1310 = vmatprep.subr.mxu0 0.0
      %1311 = vmatpush1.msra.mxu0 0.0
      %1312 = vmatprep.subr.mxu0 0.0
      %1313 = vmatpush1.msra.mxu0 0.0
      %1314 = vmatprep.subr.mxu0 0.0
      %1315 = vmatpush1.msra.mxu0 0.0
      %1316 = vmatprep.subr.mxu0 0.0
      %1317 = vmatpush1.msra.mxu0 0.0
      %1318 = vmatprep.subr.mxu0 0.0
      %1319 = vmatpush1.msra.mxu0 0.0
      %1320 = vmatprep.subr.mxu0 0.0
      %1321 = vmatpush1.msra.mxu0 0.0
      %1322 = vmatprep.subr.mxu0 0.0
      %1323 = vmatpush1.msra.mxu0 0.0
      %1324 = vmatprep.subr.mxu0 0.0
      %1325 = vmatpush1.msra.mxu0 0.0
      %1326 = vmatprep.subr.mxu0 0.0
      %1327 = vmatpush1.msra.mxu0 0.0
      %1328 = vmatprep.subr.mxu0 0.0
      %1329 = vmatpush1.msra.mxu0 0.0
      %1330 = vmatprep.subr.mxu0 0.0
      %1331 = vmatpush1.msra.mxu0 0.0
      %1332 = vmatprep.subr.mxu0 0.0
      %1333 = vmatpush1.msra.mxu0 0.0
      %1334 = vmatprep.subr.mxu0 0.0
      %1335 = vmatpush1.msra.mxu0 0.0
      %1336 = vmatprep.subr.mxu0 0.0
      %1337 = vmatpush1.msra.mxu0 0.0
      %1338 = vmatprep.subr.mxu0 %v1306
      %1339 = vmatpush1.msra.mxu0 %v1304
      %1340 = vmatprep.subr.mxu0 0.0
      %1341 = vmatpush2.msra.mxu0 0.0
      %1342 = vmatprep.subr.mxu0 0.0
      %1343 = vmatpush2.msra.mxu0 0.0
      %1344 = vmatprep.subr.mxu0 0.0
      %1345 = vmatpush2.msra.mxu0 0.0
      %1346 = vmatprep.subr.mxu0 0.0
      %1347 = vmatpush2.msra.mxu0 0.0
      %1348 = vmatprep.subr.mxu0 0.0
      %1349 = vmatpush2.msra.mxu0 0.0
      %1350 = vmatprep.subr.mxu0 0.0
      %1351 = vmatpush2.msra.mxu0 0.0
      %1352 = vmatprep.subr.mxu0 0.0
      %1353 = vmatpush2.msra.mxu0 0.0
      %1354 = vmatprep.subr.mxu0 0.0
      %1355 = vmatpush2.msra.mxu0 0.0
      %1356 = vmatprep.subr.mxu0 0.0
      %1357 = vmatpush2.msra.mxu0 0.0
      %1358 = vmatprep.subr.mxu0 0.0
      %1359 = vmatpush2.msra.mxu0 0.0
      %1360 = vmatprep.subr.mxu0 0.0
      %1361 = vmatpush2.msra.mxu0 0.0
      %1362 = vmatprep.subr.mxu0 0.0
      %1363 = vmatpush2.msra.mxu0 0.0
      %1364 = vmatprep.subr.mxu0 0.0
      %1365 = vmatpush2.msra.mxu0 0.0
      %1366 = vmatprep.subr.mxu0 0.0
      %1367 = vmatpush2.msra.mxu0 0.0
      %1368 = vmatprep.subr.mxu0 0.0
      %1369 = vmatpush2.msra.mxu0 0.0
      %1370 = vmatprep.subr.mxu0 0.0
      %1371 = vmatpush2.msra.mxu0 0.0
      %1372 = vmatprep.mubr.f32.mxu0 0.0
      %1373 = vmatmul.mubr.f32.gmra.mxu0 %v1302
      %v1374 = vpop.f32.mrf.mxu0
      %v1375 = vadd.f32 0.0, %v1374
      %v1376 = vpop.f32.mrf.mxu0
      %v1377 = vadd.f32 0.0, %v1376
      %1378 = vdwg.mxu0
      %v1379 = vadd.f32 %v1264, %v1375
      %v1380 = vadd.f32 %v1265, %v1377
      %s1381 = scalar_lea.vmem %s12, 6
      %v1382 = vld [vmem:[%s1381] ss:$8 sm:$0x3]
      %s1383 = scalar_lea.vmem %s7, 24
      %v1384 = vld [vmem:[%s1383] sm:$0xf]
      %v1386 = vlaneseq
      %v1387 = vshrl.u32 %v1386, 7
      %v1388 = vsub.s32 0, %v1387
      %v1389 = vrot.slane %v1382, %v1388
      %v1390 = vlaneseq
      %v1391 = vshrl.u32 %v1390, 7
      %v1392 = vsub.s32 1, %v1391
      %v1393 = vrot.slane %v1382, %v1392
      %1394 = vrot.lane.b32.xlu0 %v1389, 15
      %v1395 = vpop.permute.xlu0 %1394
      %1396 = vrot.lane.b32.xlu0 %v1393, 15
      %v1397 = vpop.permute.xlu0 %1396
      %v1398 = vsel %vm967, %v1395, %v1397
      %v1402 = vmul.f32 %v703, %v1395
      %v1403 = vmul.f32 %v704, %v1398
      %v1404 = vmul.f32 %v1397, 0.0
      %1408 = vrot.lane.b32.xlu0 %v1402, 113
      %v1409 = vpop.permute.xlu0 %1408
      %1410 = vrot.lane.b32.xlu0 %v1403, 113
      %v1411 = vpop.permute.xlu0 %1410
      %1412 = vrot.lane.b32.xlu0 %v1404, 113
      %v1413 = vpop.permute.xlu0 %1412
      %v1414 = vsel %vm950, %v1409, %v1411
      %v1415 = vsel %vm950, %v1411, %v1413
      %v1417 = vsel %vm451, %v1384, 0
      %v1419 = vsel %vm455, %v1414, 0
      %v1421 = vsel %vm455, %v1415, 0
      %1423 = vmatprep.subr.mxu0 0.0
      %1424 = vmatpush1.msra.mxu0 0.0
      %1425 = vmatprep.subr.mxu0 0.0
      %1426 = vmatpush1.msra.mxu0 0.0
      %1427 = vmatprep.subr.mxu0 0.0
      %1428 = vmatpush1.msra.mxu0 0.0
      %1429 = vmatprep.subr.mxu0 0.0
      %1430 = vmatpush1.msra.mxu0 0.0
      %1431 = vmatprep.subr.mxu0 0.0
      %1432 = vmatpush1.msra.mxu0 0.0
      %1433 = vmatprep.subr.mxu0 0.0
      %1434 = vmatpush1.msra.mxu0 0.0
      %1435 = vmatprep.subr.mxu0 0.0
      %1436 = vmatpush1.msra.mxu0 0.0
      %1437 = vmatprep.subr.mxu0 0.0
      %1438 = vmatpush1.msra.mxu0 0.0
      %1439 = vmatprep.subr.mxu0 0.0
      %1440 = vmatpush1.msra.mxu0 0.0
      %1441 = vmatprep.subr.mxu0 0.0
      %1442 = vmatpush1.msra.mxu0 0.0
      %1443 = vmatprep.subr.mxu0 0.0
      %1444 = vmatpush1.msra.mxu0 0.0
      %1445 = vmatprep.subr.mxu0 0.0
      %1446 = vmatpush1.msra.mxu0 0.0
      %1447 = vmatprep.subr.mxu0 0.0
      %1448 = vmatpush1.msra.mxu0 0.0
      %1449 = vmatprep.subr.mxu0 0.0
      %1450 = vmatpush1.msra.mxu0 0.0
      %1451 = vmatprep.subr.mxu0 0.0
      %1452 = vmatpush1.msra.mxu0 0.0
      %1453 = vmatprep.subr.mxu0 %v1421
      %1454 = vmatpush1.msra.mxu0 %v1419
      %1455 = vmatprep.subr.mxu0 0.0
      %1456 = vmatpush2.msra.mxu0 0.0
      %1457 = vmatprep.subr.mxu0 0.0
      %1458 = vmatpush2.msra.mxu0 0.0
      %1459 = vmatprep.subr.mxu0 0.0
      %1460 = vmatpush2.msra.mxu0 0.0
      %1461 = vmatprep.subr.mxu0 0.0
      %1462 = vmatpush2.msra.mxu0 0.0
      %1463 = vmatprep.subr.mxu0 0.0
      %1464 = vmatpush2.msra.mxu0 0.0
      %1465 = vmatprep.subr.mxu0 0.0
      %1466 = vmatpush2.msra.mxu0 0.0
      %1467 = vmatprep.subr.mxu0 0.0
      %1468 = vmatpush2.msra.mxu0 0.0
      %1469 = vmatprep.subr.mxu0 0.0
      %1470 = vmatpush2.msra.mxu0 0.0
      %1471 = vmatprep.subr.mxu0 0.0
      %1472 = vmatpush2.msra.mxu0 0.0
      %1473 = vmatprep.subr.mxu0 0.0
      %1474 = vmatpush2.msra.mxu0 0.0
      %1475 = vmatprep.subr.mxu0 0.0
      %1476 = vmatpush2.msra.mxu0 0.0
      %1477 = vmatprep.subr.mxu0 0.0
      %1478 = vmatpush2.msra.mxu0 0.0
      %1479 = vmatprep.subr.mxu0 0.0
      %1480 = vmatpush2.msra.mxu0 0.0
      %1481 = vmatprep.subr.mxu0 0.0
      %1482 = vmatpush2.msra.mxu0 0.0
      %1483 = vmatprep.subr.mxu0 0.0
      %1484 = vmatpush2.msra.mxu0 0.0
      %1485 = vmatprep.subr.mxu0 0.0
      %1486 = vmatpush2.msra.mxu0 0.0
      %1487 = vmatprep.mubr.f32.mxu0 0.0
      %1488 = vmatmul.mubr.f32.gmra.mxu0 %v1417
      %v1489 = vpop.f32.mrf.mxu0
      %v1490 = vadd.f32 0.0, %v1489
      %v1491 = vpop.f32.mrf.mxu0
      %v1492 = vadd.f32 0.0, %v1491
      %1493 = vdwg.mxu0
      %v1494 = vadd.f32 %v1379, %v1490
      %v1495 = vadd.f32 %v1380, %v1492
      %s1496 = scalar_lea.vmem %s12, 7
      %v1497 = vld [vmem:[%s1496] ss:$8 sm:$0x3]
      %s1498 = scalar_lea.vmem %s7, 28
      %v1499 = vld [vmem:[%s1498] sm:$0xf]
      %v1501 = vlaneseq
      %v1502 = vshrl.u32 %v1501, 7
      %v1503 = vsub.s32 0, %v1502
      %v1504 = vrot.slane %v1497, %v1503
      %v1505 = vlaneseq
      %v1506 = vshrl.u32 %v1505, 7
      %v1507 = vsub.s32 1, %v1506
      %v1508 = vrot.slane %v1497, %v1507
      %1509 = vrot.lane.b32.xlu0 %v1504, 16
      %v1510 = vpop.permute.xlu0 %1509
      %1511 = vrot.lane.b32.xlu0 %v1508, 16
      %v1512 = vpop.permute.xlu0 %1511
      %v1513 = vsel %vm762, %v1510, %v1512
      %v1517 = vmul.f32 %v703, %v1510
      %v1518 = vmul.f32 %v704, %v1513
      %v1519 = vmul.f32 %v1512, 0.0
      %1523 = vrot.lane.b32.xlu0 %v1517, 112
      %v1524 = vpop.permute.xlu0 %1523
      %1525 = vrot.lane.b32.xlu0 %v1518, 112
      %v1526 = vpop.permute.xlu0 %1525
      %1527 = vrot.lane.b32.xlu0 %v1519, 112
      %v1528 = vpop.permute.xlu0 %1527
      %v1529 = vsel %vm745, %v1524, %v1526
      %v1530 = vsel %vm745, %v1526, %v1528
      %v1532 = vsel %vm451, %v1499, 0
      %v1534 = vsel %vm455, %v1529, 0
      %v1536 = vsel %vm455, %v1530, 0
      %1538 = vmatprep.subr.mxu0 0.0
      %1539 = vmatpush1.msra.mxu0 0.0
      %1540 = vmatprep.subr.mxu0 0.0
      %1541 = vmatpush1.msra.mxu0 0.0
      %1542 = vmatprep.subr.mxu0 0.0
      %1543 = vmatpush1.msra.mxu0 0.0
      %1544 = vmatprep.subr.mxu0 0.0
      %1545 = vmatpush1.msra.mxu0 0.0
      %1546 = vmatprep.subr.mxu0 0.0
      %1547 = vmatpush1.msra.mxu0 0.0
      %1548 = vmatprep.subr.mxu0 0.0
      %1549 = vmatpush1.msra.mxu0 0.0
      %1550 = vmatprep.subr.mxu0 0.0
      %1551 = vmatpush1.msra.mxu0 0.0
      %1552 = vmatprep.subr.mxu0 0.0
      %1553 = vmatpush1.msra.mxu0 0.0
      %1554 = vmatprep.subr.mxu0 0.0
      %1555 = vmatpush1.msra.mxu0 0.0
      %1556 = vmatprep.subr.mxu0 0.0
      %1557 = vmatpush1.msra.mxu0 0.0
      %1558 = vmatprep.subr.mxu0 0.0
      %1559 = vmatpush1.msra.mxu0 0.0
      %1560 = vmatprep.subr.mxu0 0.0
      %1561 = vmatpush1.msra.mxu0 0.0
      %1562 = vmatprep.subr.mxu0 0.0
      %1563 = vmatpush1.msra.mxu0 0.0
      %1564 = vmatprep.subr.mxu0 0.0
      %1565 = vmatpush1.msra.mxu0 0.0
      %1566 = vmatprep.subr.mxu0 0.0
      %1567 = vmatpush1.msra.mxu0 0.0
      %1568 = vmatprep.subr.mxu0 %v1536
      %1569 = vmatpush1.msra.mxu0 %v1534
      %1570 = vmatprep.subr.mxu0 0.0
      %1571 = vmatpush2.msra.mxu0 0.0
      %1572 = vmatprep.subr.mxu0 0.0
      %1573 = vmatpush2.msra.mxu0 0.0
      %1574 = vmatprep.subr.mxu0 0.0
      %1575 = vmatpush2.msra.mxu0 0.0
      %1576 = vmatprep.subr.mxu0 0.0
      %1577 = vmatpush2.msra.mxu0 0.0
      %1578 = vmatprep.subr.mxu0 0.0
      %1579 = vmatpush2.msra.mxu0 0.0
      %1580 = vmatprep.subr.mxu0 0.0
      %1581 = vmatpush2.msra.mxu0 0.0
      %1582 = vmatprep.subr.mxu0 0.0
      %1583 = vmatpush2.msra.mxu0 0.0
      %1584 = vmatprep.subr.mxu0 0.0
      %1585 = vmatpush2.msra.mxu0 0.0
      %1586 = vmatprep.subr.mxu0 0.0
      %1587 = vmatpush2.msra.mxu0 0.0
      %1588 = vmatprep.subr.mxu0 0.0
      %1589 = vmatpush2.msra.mxu0 0.0
      %1590 = vmatprep.subr.mxu0 0.0
      %1591 = vmatpush2.msra.mxu0 0.0
      %1592 = vmatprep.subr.mxu0 0.0
      %1593 = vmatpush2.msra.mxu0 0.0
      %1594 = vmatprep.subr.mxu0 0.0
      %1595 = vmatpush2.msra.mxu0 0.0
      %1596 = vmatprep.subr.mxu0 0.0
      %1597 = vmatpush2.msra.mxu0 0.0
      %1598 = vmatprep.subr.mxu0 0.0
      %1599 = vmatpush2.msra.mxu0 0.0
      %1600 = vmatprep.subr.mxu0 0.0
      %1601 = vmatpush2.msra.mxu0 0.0
      %1602 = vmatprep.mubr.f32.mxu0 0.0
      %1603 = vmatmul.mubr.f32.gmra.mxu0 %v1532
      %v1604 = vpop.f32.mrf.mxu0
      %v1605 = vadd.f32 0.0, %v1604
      %v1606 = vpop.f32.mrf.mxu0
      %v1607 = vadd.f32 0.0, %v1606
      %1608 = vdwg.mxu0
      %v1609 = vadd.f32 %v1494, %v1605
      %v1610 = vadd.f32 %v1495, %v1607
      %s1611 = scalar_lea.vmem %s12, 16
      %v1612 = vld [vmem:[%s1611] ss:$8 sm:$0x3]
      %s1613 = scalar_lea.vmem %s7, 32
      %v1614 = vld [vmem:[%s1613] sm:$0xf]
      %v1616 = vlaneseq
      %v1617 = vshrl.u32 %v1616, 7
      %v1618 = vsub.s32 0, %v1617
      %v1619 = vrot.slane %v1612, %v1618
      %v1620 = vlaneseq
      %v1621 = vshrl.u32 %v1620, 7
      %v1622 = vsub.s32 1, %v1621
      %v1623 = vrot.slane %v1612, %v1622
      %1624 = vrot.lane.b32.xlu0 %v1619, 17
      %v1625 = vpop.permute.xlu0 %1624
      %1626 = vrot.lane.b32.xlu0 %v1623, 17
      %v1627 = vpop.permute.xlu0 %1626
      %v1628 = vsel %vm852, %v1625, %v1627
      %v1632 = vmul.f32 %v703, %v1625
      %v1633 = vmul.f32 %v704, %v1628
      %v1634 = vmul.f32 %v1627, 0.0
      %1638 = vrot.lane.b32.xlu0 %v1632, 111
      %v1639 = vpop.permute.xlu0 %1638
      %1640 = vrot.lane.b32.xlu0 %v1633, 111
      %v1641 = vpop.permute.xlu0 %1640
      %1642 = vrot.lane.b32.xlu0 %v1634, 111
      %v1643 = vpop.permute.xlu0 %1642
      %v1644 = vsel %vm720, %v1639, %v1641
      %v1645 = vsel %vm720, %v1641, %v1643
      %v1647 = vsel %vm451, %v1614, 0
      %v1649 = vsel %vm455, %v1644, 0
      %v1651 = vsel %vm455, %v1645, 0
      %1653 = vmatprep.subr.mxu0 0.0
      %1654 = vmatpush1.msra.mxu0 0.0
      %1655 = vmatprep.subr.mxu0 0.0
      %1656 = vmatpush1.msra.mxu0 0.0
      %1657 = vmatprep.subr.mxu0 0.0
      %1658 = vmatpush1.msra.mxu0 0.0
      %1659 = vmatprep.subr.mxu0 0.0
      %1660 = vmatpush1.msra.mxu0 0.0
      %1661 = vmatprep.subr.mxu0 0.0
      %1662 = vmatpush1.msra.mxu0 0.0
      %1663 = vmatprep.subr.mxu0 0.0
      %1664 = vmatpush1.msra.mxu0 0.0
      %1665 = vmatprep.subr.mxu0 0.0
      %1666 = vmatpush1.msra.mxu0 0.0
      %1667 = vmatprep.subr.mxu0 0.0
      %1668 = vmatpush1.msra.mxu0 0.0
      %1669 = vmatprep.subr.mxu0 0.0
      %1670 = vmatpush1.msra.mxu0 0.0
      %1671 = vmatprep.subr.mxu0 0.0
      %1672 = vmatpush1.msra.mxu0 0.0
      %1673 = vmatprep.subr.mxu0 0.0
      %1674 = vmatpush1.msra.mxu0 0.0
      %1675 = vmatprep.subr.mxu0 0.0
      %1676 = vmatpush1.msra.mxu0 0.0
      %1677 = vmatprep.subr.mxu0 0.0
      %1678 = vmatpush1.msra.mxu0 0.0
      %1679 = vmatprep.subr.mxu0 0.0
      %1680 = vmatpush1.msra.mxu0 0.0
      %1681 = vmatprep.subr.mxu0 0.0
      %1682 = vmatpush1.msra.mxu0 0.0
      %1683 = vmatprep.subr.mxu0 %v1651
      %1684 = vmatpush1.msra.mxu0 %v1649
      %1685 = vmatprep.subr.mxu0 0.0
      %1686 = vmatpush2.msra.mxu0 0.0
      %1687 = vmatprep.subr.mxu0 0.0
      %1688 = vmatpush2.msra.mxu0 0.0
      %1689 = vmatprep.subr.mxu0 0.0
      %1690 = vmatpush2.msra.mxu0 0.0
      %1691 = vmatprep.subr.mxu0 0.0
      %1692 = vmatpush2.msra.mxu0 0.0
      %1693 = vmatprep.subr.mxu0 0.0
      %1694 = vmatpush2.msra.mxu0 0.0
      %1695 = vmatprep.subr.mxu0 0.0
      %1696 = vmatpush2.msra.mxu0 0.0
      %1697 = vmatprep.subr.mxu0 0.0
      %1698 = vmatpush2.msra.mxu0 0.0
      %1699 = vmatprep.subr.mxu0 0.0
      %1700 = vmatpush2.msra.mxu0 0.0
      %1701 = vmatprep.subr.mxu0 0.0
      %1702 = vmatpush2.msra.mxu0 0.0
      %1703 = vmatprep.subr.mxu0 0.0
      %1704 = vmatpush2.msra.mxu0 0.0
      %1705 = vmatprep.subr.mxu0 0.0
      %1706 = vmatpush2.msra.mxu0 0.0
      %1707 = vmatprep.subr.mxu0 0.0
      %1708 = vmatpush2.msra.mxu0 0.0
      %1709 = vmatprep.subr.mxu0 0.0
      %1710 = vmatpush2.msra.mxu0 0.0
      %1711 = vmatprep.subr.mxu0 0.0
      %1712 = vmatpush2.msra.mxu0 0.0
      %1713 = vmatprep.subr.mxu0 0.0
      %1714 = vmatpush2.msra.mxu0 0.0
      %1715 = vmatprep.subr.mxu0 0.0
      %1716 = vmatpush2.msra.mxu0 0.0
      %1717 = vmatprep.mubr.f32.mxu0 0.0
      %1718 = vmatmul.mubr.f32.gmra.mxu0 %v1647
      %v1719 = vpop.f32.mrf.mxu0
      %v1720 = vadd.f32 0.0, %v1719
      %v1721 = vpop.f32.mrf.mxu0
      %v1722 = vadd.f32 0.0, %v1721
      %1723 = vdwg.mxu0
      %v1724 = vadd.f32 %v1609, %v1720
      %v1725 = vadd.f32 %v1610, %v1722
      %v1726 = vld [vmem:[%s8] sm:$0xf]
      %1728 = vset.pattern.permute.xlu0 0
      %1729 = vperm.xlu0 %1728, %v1726
      %v1730 = vpop.permute.xlu0 %1729
      %v1732 = vadd.f32 %v1724, %v1730
      %v1733 = vadd.f32 %v1725, %v1730
      %v1734 = vmax.f32 %v1732, 0.0
      %v1735 = vmax.f32 %v1733, 0.0
      %v1736 = vadd.f32 %v531, %v1734
      %v1737 = vadd.f32 %v532, %v1735
      %v1738 = vld [vmem:[%s9] sm:$0xff]
      %v1739 = vld [vmem:[%s10] sm:$0xff]
      %v1741 = vsel %vm451, %v1739, 0
      %v1744 = vsel %vm455, %v614, 0
      %v1747 = vsel %vm455, %v615, 0
      %1749 = vmatprep.subr.mxu0 0.0
      %1750 = vmatpush1.msra.mxu0 0.0
      %1751 = vmatprep.subr.mxu0 0.0
      %1752 = vmatpush1.msra.mxu0 0.0
      %1753 = vmatprep.subr.mxu0 0.0
      %1754 = vmatpush1.msra.mxu0 0.0
      %1755 = vmatprep.subr.mxu0 0.0
      %1756 = vmatpush1.msra.mxu0 0.0
      %1757 = vmatprep.subr.mxu0 0.0
      %1758 = vmatpush1.msra.mxu0 0.0
      %1759 = vmatprep.subr.mxu0 0.0
      %1760 = vmatpush1.msra.mxu0 0.0
      %1761 = vmatprep.subr.mxu0 0.0
      %1762 = vmatpush1.msra.mxu0 0.0
      %1763 = vmatprep.subr.mxu0 0.0
      %1764 = vmatpush1.msra.mxu0 0.0
      %1765 = vmatprep.subr.mxu0 0.0
      %1766 = vmatpush1.msra.mxu0 0.0
      %1767 = vmatprep.subr.mxu0 0.0
      %1768 = vmatpush1.msra.mxu0 0.0
      %1769 = vmatprep.subr.mxu0 0.0
      %1770 = vmatpush1.msra.mxu0 0.0
      %1771 = vmatprep.subr.mxu0 0.0
      %1772 = vmatpush1.msra.mxu0 0.0
      %1773 = vmatprep.subr.mxu0 0.0
      %1774 = vmatpush1.msra.mxu0 0.0
      %1775 = vmatprep.subr.mxu0 0.0
      %1776 = vmatpush1.msra.mxu0 0.0
      %1777 = vmatprep.subr.mxu0 0.0
      %1778 = vmatpush1.msra.mxu0 0.0
      %1779 = vmatprep.subr.mxu0 %v1747
      %1780 = vmatpush1.msra.mxu0 %v1744
      %1781 = vmatprep.subr.mxu0 0.0
      %1782 = vmatpush2.msra.mxu0 0.0
      %1783 = vmatprep.subr.mxu0 0.0
      %1784 = vmatpush2.msra.mxu0 0.0
      %1785 = vmatprep.subr.mxu0 0.0
      %1786 = vmatpush2.msra.mxu0 0.0
      %1787 = vmatprep.subr.mxu0 0.0
      %1788 = vmatpush2.msra.mxu0 0.0
      %1789 = vmatprep.subr.mxu0 0.0
      %1790 = vmatpush2.msra.mxu0 0.0
      %1791 = vmatprep.subr.mxu0 0.0
      %1792 = vmatpush2.msra.mxu0 0.0
      %1793 = vmatprep.subr.mxu0 0.0
      %1794 = vmatpush2.msra.mxu0 0.0
      %1795 = vmatprep.subr.mxu0 0.0
      %1796 = vmatpush2.msra.mxu0 0.0
      %1797 = vmatprep.subr.mxu0 0.0
      %1798 = vmatpush2.msra.mxu0 0.0
      %1799 = vmatprep.subr.mxu0 0.0
      %1800 = vmatpush2.msra.mxu0 0.0
      %1801 = vmatprep.subr.mxu0 0.0
      %1802 = vmatpush2.msra.mxu0 0.0
      %1803 = vmatprep.subr.mxu0 0.0
      %1804 = vmatpush2.msra.mxu0 0.0
      %1805 = vmatprep.subr.mxu0 0.0
      %1806 = vmatpush2.msra.mxu0 0.0
      %1807 = vmatprep.subr.mxu0 0.0
      %1808 = vmatpush2.msra.mxu0 0.0
      %1809 = vmatprep.subr.mxu0 0.0
      %1810 = vmatpush2.msra.mxu0 0.0
      %1811 = vmatprep.subr.mxu0 0.0
      %1812 = vmatpush2.msra.mxu0 0.0
      %1813 = vmatprep.mubr.f32.mxu0 0.0
      %1814 = vmatmul.mubr.f32.gmra.mxu0 %v1741
      %v1815 = vpop.f32.mrf.mxu0
      %v1816 = vadd.f32 0.0, %v1815
      %v1817 = vpop.f32.mrf.mxu0
      %v1818 = vadd.f32 0.0, %v1817
      %1819 = vdwg.mxu0
      %v1821 = vsel %vm451, %v1738, 0
      %v1824 = vsel %vm455, %v1736, 0
      %v1827 = vsel %vm455, %v1737, 0
      %1829 = vmatprep.subr.mxu0 0.0
      %1830 = vmatpush1.msra.mxu0 0.0
      %1831 = vmatprep.subr.mxu0 0.0
      %1832 = vmatpush1.msra.mxu0 0.0
      %1833 = vmatprep.subr.mxu0 0.0
      %1834 = vmatpush1.msra.mxu0 0.0
      %1835 = vmatprep.subr.mxu0 0.0
      %1836 = vmatpush1.msra.mxu0 0.0
      %1837 = vmatprep.subr.mxu0 0.0
      %1838 = vmatpush1.msra.mxu0 0.0
      %1839 = vmatprep.subr.mxu0 0.0
      %1840 = vmatpush1.msra.mxu0 0.0
      %1841 = vmatprep.subr.mxu0 0.0
      %1842 = vmatpush1.msra.mxu0 0.0
      %1843 = vmatprep.subr.mxu0 0.0
      %1844 = vmatpush1.msra.mxu0 0.0
      %1845 = vmatprep.subr.mxu0 0.0
      %1846 = vmatpush1.msra.mxu0 0.0
      %1847 = vmatprep.subr.mxu0 0.0
      %1848 = vmatpush1.msra.mxu0 0.0
      %1849 = vmatprep.subr.mxu0 0.0
      %1850 = vmatpush1.msra.mxu0 0.0
      %1851 = vmatprep.subr.mxu0 0.0
      %1852 = vmatpush1.msra.mxu0 0.0
      %1853 = vmatprep.subr.mxu0 0.0
      %1854 = vmatpush1.msra.mxu0 0.0
      %1855 = vmatprep.subr.mxu0 0.0
      %1856 = vmatpush1.msra.mxu0 0.0
      %1857 = vmatprep.subr.mxu0 0.0
      %1858 = vmatpush1.msra.mxu0 0.0
      %1859 = vmatprep.subr.mxu0 %v1827
      %1860 = vmatpush1.msra.mxu0 %v1824
      %1861 = vmatprep.subr.mxu0 0.0
      %1862 = vmatpush2.msra.mxu0 0.0
      %1863 = vmatprep.subr.mxu0 0.0
      %1864 = vmatpush2.msra.mxu0 0.0
      %1865 = vmatprep.subr.mxu0 0.0
      %1866 = vmatpush2.msra.mxu0 0.0
      %1867 = vmatprep.subr.mxu0 0.0
      %1868 = vmatpush2.msra.mxu0 0.0
      %1869 = vmatprep.subr.mxu0 0.0
      %1870 = vmatpush2.msra.mxu0 0.0
      %1871 = vmatprep.subr.mxu0 0.0
      %1872 = vmatpush2.msra.mxu0 0.0
      %1873 = vmatprep.subr.mxu0 0.0
      %1874 = vmatpush2.msra.mxu0 0.0
      %1875 = vmatprep.subr.mxu0 0.0
      %1876 = vmatpush2.msra.mxu0 0.0
      %1877 = vmatprep.subr.mxu0 0.0
      %1878 = vmatpush2.msra.mxu0 0.0
      %1879 = vmatprep.subr.mxu0 0.0
      %1880 = vmatpush2.msra.mxu0 0.0
      %1881 = vmatprep.subr.mxu0 0.0
      %1882 = vmatpush2.msra.mxu0 0.0
      %1883 = vmatprep.subr.mxu0 0.0
      %1884 = vmatpush2.msra.mxu0 0.0
      %1885 = vmatprep.subr.mxu0 0.0
      %1886 = vmatpush2.msra.mxu0 0.0
      %1887 = vmatprep.subr.mxu0 0.0
      %1888 = vmatpush2.msra.mxu0 0.0
      %1889 = vmatprep.subr.mxu0 0.0
      %1890 = vmatpush2.msra.mxu0 0.0
      %1891 = vmatprep.subr.mxu0 0.0
      %1892 = vmatpush2.msra.mxu0 0.0
      %1893 = vmatprep.mubr.f32.mxu0 0.0
      %1894 = vmatmul.mubr.f32.gmra.mxu0 %v1821
      %v1895 = vpop.f32.mrf.mxu0
      %v1896 = vadd.f32 %v1816, %v1895
      %v1897 = vpop.f32.mrf.mxu0
      %v1898 = vadd.f32 %v1818, %v1897
      %1899 = vdwg.mxu0
      %v1900 = vld [vmem:[%s11] sm:$0xff]
      %1902 = vset.pattern.permute.xlu0 0
      %1903 = vperm.xlu0 %1902, %v1900
      %v1904 = vpop.permute.xlu0 %1903
      %v1906 = vadd.f32 %v1896, %v1904
      %v1907 = vadd.f32 %v1898, %v1904
      %v1908 = vmax.f32 %v1906, 0.0
      %v1909 = vmax.f32 %v1907, 0.0
      %1910 = vst [vmem:[%s440] sm:$0xff] %v1908
      %1911 = vst [vmem:[%s440 + $0x8] sm:$0xff] %v1909
      %p1912 = scmp.lt.s32.totalorder %s24, 1
      %s1913 = scalar_select %p1912, %s24, 1
      %s1914 = smul.addr %s1913, 2
      %s1915 = smul.addr %s1914, 8
      %s1916 = scalar_lea.vmem %s13, %s1915
      // Predicated region
      $region73: #{c3_forward.1} parent=71 // pred_check
        %p1917 = pneg %p320
      $region74: #{c3_forward.1} parent=71 // pred_check_branch
        %1919 = sbr.rel (%p1917) target = $region76
      $region75: #{c3_forward.1} parent=71 // pred_region
        _
      $region76: #{c3_forward.1} parent=71 // pred_fallthru
        _
    $region72: #{c3_forward.1} parent=5 // pred_fallthru
      _
    %p1920 = scmp.le.s32.totalorder 2, %s19
    // Predicated region
    $region77: #{c3_forward.1} parent=5 // pred_check
      %p1921 = pneg %p1920
    $region78: #{c3_forward.1} parent=5 // pred_check_branch
      %1923 = sbr.rel (%p1921) target = $region80
    $region79: #{c3_forward.1} parent=5 // pred_region
      %s1924 = ssub.s32 %s19, 2
      // Predicated region
      $region81: #{c3_forward.1} parent=79 // pred_check
        %p1925 = pneg %p326
      $region82: #{c3_forward.1} parent=79 // pred_check_branch
        %1927 = sbr.rel (%p1925) target = $region84
      $region83: #{c3_forward.1} parent=79 // pred_region
        %p1928 = scmp.lt.s32.totalorder %s25, 1
        %s1929 = scalar_select %p1928, %s25, 1
        %s1930 = smul.addr %s1929, 2
        %s1931 = smul.addr %s1930, 8
        %s1932 = scalar_lea.vmem %s13, %s1931
      $region84: #{c3_forward.1} parent=79 // pred_fallthru
        _
    $region80: #{c3_forward.1} parent=5 // pred_fallthru
      _
  $region6: #{c3_forward.1} parent=0 // loop_footer
    %s23 = sadd.s32 1, %s19
  $region7: #{c3_forward.1} parent=0 // loop_footer_branch
    %18 = sbr.rel target = $region3
  $region8: #{c3_forward.1} parent=0 // loop_exit
    _

</llo_original>
